<compile_context>
chip_gen: v7x
topology: tpu7x:2x2x1
jax: 0.10.0
libtpu: 0.0.40
codegen_flags: <defaults>
</compile_context>

<pallas_src>
import functools

import jax
import jax.numpy as jnp
import numpy as np
from jax.experimental import pallas as pl
from jax.experimental.pallas import tpu as pltpu


# ----------------------------------------------------------------------------
# Fused kernel: all layers + linear head, one invocation.
# Ref order: x, (wih_t, whh_t, bias) * num_layers, w_lin_t, b_lin, out, act.
# ----------------------------------------------------------------------------
def _fused_lstm_generator_kernel(*refs, num_layers, seq_len, batch, hidden):
    T, B, H = seq_len, batch, hidden

    x_ref = refs[0]
    w_lin_ref = refs[1 + 3 * num_layers]
    b_lin_ref = refs[2 + 3 * num_layers]
    out_ref = refs[3 + 3 * num_layers]
    act_ref = refs[4 + 3 * num_layers]          # VMEM scratch (T*B, H)

    cur = x_ref[...]                            # (T*B, D_in), time-major

    for layer in range(num_layers):
        wih = refs[1 + 3 * layer][...]          # (D_in_l, 4H)
        whh = refs[2 + 3 * layer][...]          # (H, 4H)
        bias = refs[3 + 3 * layer][...]         # (1, 4H)  (b_ih + b_hh)

        # Hoisted input projection: one matmul for the whole sequence.
        gx = jnp.dot(cur, wih, preferred_element_type=jnp.float32) + bias

        h = jnp.zeros((B, H), jnp.float32)
        c = jnp.zeros((B, H), jnp.float32)

        # Fully unrolled recurrence (T small & static): only h @ W_hh and the
        # gate elementwise math remain on the serial critical path.
        for t in range(T):
            gates = gx[t * B:(t + 1) * B, :] + jnp.dot(
                h, whh, preferred_element_type=jnp.float32)      # (B, 4H)
            i_g = jax.nn.sigmoid(gates[:, 0 * H:1 * H])
            f_g = jax.nn.sigmoid(gates[:, 1 * H:2 * H])
            g_g = jnp.tanh(gates[:, 2 * H:3 * H])
            o_g = jax.nn.sigmoid(gates[:, 3 * H:4 * H])
            c = f_g * c + i_g * g_g
            h = o_g * jnp.tanh(c)
            act_ref[t * B:(t + 1) * B, :] = h

        cur = act_ref[...]                      # (T*B, H) -> next layer / head

    # Linear head on the resident activations, written as one lane slab.
    out = jnp.dot(cur, w_lin_ref[...],
                  preferred_element_type=jnp.float32) + b_lin_ref[...]
    out_ref[...] = out.astype(out_ref.dtype)


# ----------------------------------------------------------------------------
# Parameter packing: PyTorch layout -> kernel layout (done once).
# ----------------------------------------------------------------------------
def pack_params(params):
    packed = {"lstm": [], "linear": {}}
    for p in params["lstm"]:
        packed["lstm"].append({
            "wih_t": jnp.transpose(p["w_ih"]),                  # (D_in, 4H)
            "whh_t": jnp.transpose(p["w_hh"]),                  # (H, 4H)
            "bias": (p["b_ih"] + p["b_hh"]).reshape(1, -1),     # (1, 4H)
        })
    packed["linear"]["w_t"] = jnp.transpose(params["linear"]["w"])   # (H, O)
    packed["linear"]["b"] = params["linear"]["b"].reshape(1, -1)     # (1, O)
    return packed


# ----------------------------------------------------------------------------
# Forward: one pallas_call for the whole module.
# ----------------------------------------------------------------------------
def lstm_generator_forward(x_btd, packed):
    """x_btd: (B, T, latent_dim) batch-first, matching PyTorch forward."""
    B, T, D = x_btd.shape
    layers = packed["lstm"]
    num_layers = len(layers)
    H = layers[0]["whh_t"].shape[0]
    O = packed["linear"]["w_t"].shape[1]

    # time-major flatten: row t*B + b == (t, b)
    x_tm = jnp.transpose(x_btd, (1, 0, 2)).reshape(T * B, D)

    args = [x_tm]
    in_specs = [pl.BlockSpec((T * B, D), lambda: (0, 0))]
    for p in layers:
        d_in = p["wih_t"].shape[0]
        args += [p["wih_t"], p["whh_t"], p["bias"]]
        in_specs += [
            pl.BlockSpec((d_in, 4 * H), lambda: (0, 0)),
            pl.BlockSpec((H, 4 * H), lambda: (0, 0)),
            pl.BlockSpec((1, 4 * H), lambda: (0, 0)),
        ]
    args += [packed["linear"]["w_t"], packed["linear"]["b"]]
    in_specs += [
        pl.BlockSpec((H, O), lambda: (0, 0)),
        pl.BlockSpec((1, O), lambda: (0, 0)),
    ]

    kernel = functools.partial(
        _fused_lstm_generator_kernel,
        num_layers=num_layers, seq_len=T, batch=B, hidden=H)

    out_tm = pl.pallas_call(
        kernel,
        out_shape=jax.ShapeDtypeStruct((T * B, O), jnp.float32),
        in_specs=in_specs,
        out_specs=pl.BlockSpec((T * B, O), lambda: (0, 0)),
        scratch_shapes=[pltpu.VMEM((T * B, H), jnp.float32)],   # layer acts
    )(*args)

    return jnp.transpose(out_tm.reshape(T, B, O), (1, 0, 2))    # (B, T, O)


# ----------------------------------------------------------------------------
# Pure-JAX reference (for correctness check), PyTorch-layout params.
# ----------------------------------------------------------------------------
def reference_forward(x_btd, params):
    h_seq = x_btd
    for layer_p in params["lstm"]:
        B, T, D = h_seq.shape
        H = layer_p["w_hh"].shape[1]
        wih_t = layer_p["w_ih"].T
        whh_t = layer_p["w_hh"].T
        bias = layer_p["b_ih"] + layer_p["b_hh"]

        def step(carry, x_t):
            h, c = carry
            g = x_t @ wih_t + h @ whh_t + bias
            i = jax.nn.sigmoid(g[:, 0 * H:1 * H])
            f = jax.nn.sigmoid(g[:, 1 * H:2 * H])
            gg = jnp.tanh(g[:, 2 * H:3 * H])
            o = jax.nn.sigmoid(g[:, 3 * H:4 * H])
            c_new = f * c + i * gg
            h_new = o * jnp.tanh(c_new)
            return (h_new, c_new), h_new

        init = (jnp.zeros((B, H), jnp.float32), jnp.zeros((B, H), jnp.float32))
        _, hs = jax.lax.scan(step, init, jnp.transpose(h_seq, (1, 0, 2)))
        h_seq = jnp.transpose(hs, (1, 0, 2))
    out = h_seq.reshape(-1, h_seq.shape[-1]) @ params["linear"]["w"].T \
        + params["linear"]["b"]
    return out.reshape(h_seq.shape[0], h_seq.shape[1], -1)


# ----------------------------------------------------------------------------
# Deterministic parameter init (PyTorch-style uniform(-1/sqrt(H), 1/sqrt(H))).
# ----------------------------------------------------------------------------
def init_params(key, latent_dim, out_dim, lstm_layers, hidden_dim):
    params = {"lstm": []}
    bound = 1.0 / np.sqrt(hidden_dim)
    for layer in range(lstm_layers):
        d_in = latent_dim if layer == 0 else hidden_dim
        key, k1, k2, k3, k4 = jax.random.split(key, 5)
        params["lstm"].append({
            "w_ih": jax.random.uniform(k1, (4 * hidden_dim, d_in),
                                       jnp.float32, -bound, bound),
            "w_hh": jax.random.uniform(k2, (4 * hidden_dim, hidden_dim),
                                       jnp.float32, -bound, bound),
            "b_ih": jax.random.uniform(k3, (4 * hidden_dim,),
                                       jnp.float32, -bound, bound),
            "b_hh": jax.random.uniform(k4, (4 * hidden_dim,),
                                       jnp.float32, -bound, bound),
        })
    key, k5, k6 = jax.random.split(key, 3)
    lin_bound = 1.0 / np.sqrt(hidden_dim)
    params["linear"] = {
        "w": jax.random.uniform(k5, (out_dim, hidden_dim),
                                jnp.float32, -lin_bound, lin_bound),
        "b": jax.random.uniform(k6, (out_dim,),
                                jnp.float32, -lin_bound, lin_bound),
    }
    return params


if __name__ == "__main__":
    latent_space_dim = 4
    out_space_dim = 16
    lstm_layers = 2
    lstm_hidden_dim = 32
    batch, seq = 2, 8

    key = jax.random.PRNGKey(0)
    key, pkey, xkey = jax.random.split(key, 3)
    params = init_params(pkey, latent_space_dim, out_space_dim,
                         lstm_layers, lstm_hidden_dim)
    x = jax.random.normal(xkey, (batch, seq, latent_space_dim), jnp.float32)

    packed = pack_params(params)          # one-time weight transpose/bias fuse
    fwd = jax.jit(lstm_generator_forward)
    out = jax.block_until_ready(fwd(x, packed))

    ref = jax.block_until_ready(reference_forward(x, params))
    assert out.shape == (batch, seq, out_space_dim)
    np.testing.assert_allclose(np.asarray(out), np.asarray(ref),
                               rtol=1e-5, atol=1e-5)
    print("KERNEL_OK")
</pallas_src>

<mosaic_0001>
module attributes {stable_mosaic.version = 11 : i64} {
  func.func @_fused_lstm_generator_kernel(%arg0: memref<16x4xf32, #tpu.memory_space<vmem>>, %arg1: memref<4x128xf32, #tpu.memory_space<vmem>>, %arg2: memref<32x128xf32, #tpu.memory_space<vmem>>, %arg3: memref<1x128xf32, #tpu.memory_space<vmem>>, %arg4: memref<32x128xf32, #tpu.memory_space<vmem>>, %arg5: memref<32x128xf32, #tpu.memory_space<vmem>>, %arg6: memref<1x128xf32, #tpu.memory_space<vmem>>, %arg7: memref<32x16xf32, #tpu.memory_space<vmem>>, %arg8: memref<1x16xf32, #tpu.memory_space<vmem>>, %arg9: memref<16x16xf32, #tpu.memory_space<vmem>>, %arg10: memref<16x32xf32, #tpu.memory_space<vmem>>) attributes {dimension_semantics = [], scalar_prefetch = 0 : i64, scratch_operands = 1 : i64, tpu.core_type = #tpu.core_type<tc>} {
    %c0 = arith.constant 0 : index
    %c0_0 = arith.constant 0 : index
    %0 = vector.load %arg0[%c0, %c0_0] : memref<16x4xf32, #tpu.memory_space<vmem>>, vector<16x4xf32>
    %c0_1 = arith.constant 0 : index
    %c0_2 = arith.constant 0 : index
    %1 = vector.load %arg1[%c0_1, %c0_2] : memref<4x128xf32, #tpu.memory_space<vmem>>, vector<4x128xf32>
    %c0_3 = arith.constant 0 : index
    %c0_4 = arith.constant 0 : index
    %2 = vector.load %arg2[%c0_3, %c0_4] : memref<32x128xf32, #tpu.memory_space<vmem>>, vector<32x128xf32>
    %c0_5 = arith.constant 0 : index
    %c0_6 = arith.constant 0 : index
    %3 = vector.load %arg3[%c0_5, %c0_6] : memref<1x128xf32, #tpu.memory_space<vmem>>, vector<1x128xf32>
    %cst = arith.constant dense<0.000000e+00> : vector<16x128xf32>
    %4 = tpu.matmul %0, %1, %cst {dimension_numbers = #tpu.dot_dimension_numbers<[1], [0], [0], [1], [0, 0, 1, 1], [], []>} : vector<16x4xf32>, vector<4x128xf32>, vector<16x128xf32> -> vector<16x128xf32>
    %5 = vector.broadcast %3 : vector<1x128xf32> to vector<16x128xf32>
    %6 = arith.addf %4, %5 : vector<16x128xf32>
    %cst_7 = arith.constant 0.000000e+00 : f32
    %7 = vector.broadcast %cst_7 : f32 to vector<2x32xf32>
    %cst_8 = arith.constant 0.000000e+00 : f32
    %8 = vector.broadcast %cst_8 : f32 to vector<2x32xf32>
    %9 = vector.extract_strided_slice %6 {offsets = [0, 0], sizes = [2, 128], strides = [1, 1]} : vector<16x128xf32> to vector<2x128xf32>
    %cst_9 = arith.constant dense<0.000000e+00> : vector<2x128xf32>
    %10 = tpu.matmul %7, %2, %cst_9 {dimension_numbers = #tpu.dot_dimension_numbers<[1], [0], [0], [1], [0, 0, 1, 1], [], []>} : vector<2x32xf32>, vector<32x128xf32>, vector<2x128xf32> -> vector<2x128xf32>
    %11 = arith.addf %9, %10 : vector<2x128xf32>
    %12 = vector.extract_strided_slice %11 {offsets = [0, 0], sizes = [2, 32], strides = [1, 1]} : vector<2x128xf32> to vector<2x32xf32>
    %13 = arith.negf %12 : vector<2x32xf32>
    %14 = math.exp %13 : vector<2x32xf32>
    %cst_10 = arith.constant 1.000000e+00 : f32
    %15 = vector.broadcast %cst_10 : f32 to vector<2x32xf32>
    %16 = arith.addf %15, %14 : vector<2x32xf32>
    %17 = arith.divf %15, %16 : vector<2x32xf32>
    %18 = vector.extract_strided_slice %11 {offsets = [0, 32], sizes = [2, 32], strides = [1, 1]} : vector<2x128xf32> to vector<2x32xf32>
    %19 = arith.negf %18 : vector<2x32xf32>
    %20 = math.exp %19 : vector<2x32xf32>
    %cst_11 = arith.constant 1.000000e+00 : f32
    %21 = vector.broadcast %cst_11 : f32 to vector<2x32xf32>
    %22 = arith.addf %21, %20 : vector<2x32xf32>
    %23 = arith.divf %21, %22 : vector<2x32xf32>
    %24 = vector.extract_strided_slice %11 {offsets = [0, 64], sizes = [2, 32], strides = [1, 1]} : vector<2x128xf32> to vector<2x32xf32>
    %25 = math.tanh %24 : vector<2x32xf32>
    %26 = vector.extract_strided_slice %11 {offsets = [0, 96], sizes = [2, 32], strides = [1, 1]} : vector<2x128xf32> to vector<2x32xf32>
    %27 = arith.negf %26 : vector<2x32xf32>
    %28 = math.exp %27 : vector<2x32xf32>
    %cst_12 = arith.constant 1.000000e+00 : f32
    %29 = vector.broadcast %cst_12 : f32 to vector<2x32xf32>
    %30 = arith.addf %29, %28 : vector<2x32xf32>
    %31 = arith.divf %29, %30 : vector<2x32xf32>
    %32 = arith.mulf %23, %8 : vector<2x32xf32>
    %33 = arith.mulf %17, %25 : vector<2x32xf32>
    %34 = arith.addf %32, %33 : vector<2x32xf32>
    %35 = math.tanh %34 : vector<2x32xf32>
    %36 = arith.mulf %31, %35 : vector<2x32xf32>
    %c0_13 = arith.constant 0 : index
    %c0_14 = arith.constant 0 : index
    %37 = vector.load %arg10[%c0_13, %c0_14] : memref<16x32xf32, #tpu.memory_space<vmem>>, vector<2x32xf32>
    tpu.vector_store %arg10[%c0_13, %c0_14], %36 {strides = array<i32>} : memref<16x32xf32, #tpu.memory_space<vmem>>, vector<2x32xf32>,
    %38 = vector.extract_strided_slice %6 {offsets = [2, 0], sizes = [2, 128], strides = [1, 1]} : vector<16x128xf32> to vector<2x128xf32>
    %cst_15 = arith.constant dense<0.000000e+00> : vector<2x128xf32>
    %39 = tpu.matmul %36, %2, %cst_15 {dimension_numbers = #tpu.dot_dimension_numbers<[1], [0], [0], [1], [0, 0, 1, 1], [], []>} : vector<2x32xf32>, vector<32x128xf32>, vector<2x128xf32> -> vector<2x128xf32>
    %40 = arith.addf %38, %39 : vector<2x128xf32>
    %41 = vector.extract_strided_slice %40 {offsets = [0, 0], sizes = [2, 32], strides = [1, 1]} : vector<2x128xf32> to vector<2x32xf32>
    %42 = arith.negf %41 : vector<2x32xf32>
    %43 = math.exp %42 : vector<2x32xf32>
    %cst_16 = arith.constant 1.000000e+00 : f32
    %44 = vector.broadcast %cst_16 : f32 to vector<2x32xf32>
    %45 = arith.addf %44, %43 : vector<2x32xf32>
    %46 = arith.divf %44, %45 : vector<2x32xf32>
    %47 = vector.extract_strided_slice %40 {offsets = [0, 32], sizes = [2, 32], strides = [1, 1]} : vector<2x128xf32> to vector<2x32xf32>
    %48 = arith.negf %47 : vector<2x32xf32>
    %49 = math.exp %48 : vector<2x32xf32>
    %cst_17 = arith.constant 1.000000e+00 : f32
    %50 = vector.broadcast %cst_17 : f32 to vector<2x32xf32>
    %51 = arith.addf %50, %49 : vector<2x32xf32>
    %52 = arith.divf %50, %51 : vector<2x32xf32>
    %53 = vector.extract_strided_slice %40 {offsets = [0, 64], sizes = [2, 32], strides = [1, 1]} : vector<2x128xf32> to vector<2x32xf32>
    %54 = math.tanh %53 : vector<2x32xf32>
    %55 = vector.extract_strided_slice %40 {offsets = [0, 96], sizes = [2, 32], strides = [1, 1]} : vector<2x128xf32> to vector<2x32xf32>
    %56 = arith.negf %55 : vector<2x32xf32>
    %57 = math.exp %56 : vector<2x32xf32>
    %cst_18 = arith.constant 1.000000e+00 : f32
    %58 = vector.broadcast %cst_18 : f32 to vector<2x32xf32>
    %59 = arith.addf %58, %57 : vector<2x32xf32>
    %60 = arith.divf %58, %59 : vector<2x32xf32>
    %61 = arith.mulf %52, %34 : vector<2x32xf32>
    %62 = arith.mulf %46, %54 : vector<2x32xf32>
    %63 = arith.addf %61, %62 : vector<2x32xf32>
    %64 = math.tanh %63 : vector<2x32xf32>
    %65 = arith.mulf %60, %64 : vector<2x32xf32>
    %c2 = arith.constant 2 : index
    %c0_19 = arith.constant 0 : index
    %66 = vector.load %arg10[%c2, %c0_19] : memref<16x32xf32, #tpu.memory_space<vmem>>, vector<2x32xf32>
    tpu.vector_store %arg10[%c2, %c0_19], %65 {strides = array<i32>} : memref<16x32xf32, #tpu.memory_space<vmem>>, vector<2x32xf32>,
    %67 = vector.extract_strided_slice %6 {offsets = [4, 0], sizes = [2, 128], strides = [1, 1]} : vector<16x128xf32> to vector<2x128xf32>
    %cst_20 = arith.constant dense<0.000000e+00> : vector<2x128xf32>
    %68 = tpu.matmul %65, %2, %cst_20 {dimension_numbers = #tpu.dot_dimension_numbers<[1], [0], [0], [1], [0, 0, 1, 1], [], []>} : vector<2x32xf32>, vector<32x128xf32>, vector<2x128xf32> -> vector<2x128xf32>
    %69 = arith.addf %67, %68 : vector<2x128xf32>
    %70 = vector.extract_strided_slice %69 {offsets = [0, 0], sizes = [2, 32], strides = [1, 1]} : vector<2x128xf32> to vector<2x32xf32>
    %71 = arith.negf %70 : vector<2x32xf32>
    %72 = math.exp %71 : vector<2x32xf32>
    %cst_21 = arith.constant 1.000000e+00 : f32
    %73 = vector.broadcast %cst_21 : f32 to vector<2x32xf32>
    %74 = arith.addf %73, %72 : vector<2x32xf32>
    %75 = arith.divf %73, %74 : vector<2x32xf32>
    %76 = vector.extract_strided_slice %69 {offsets = [0, 32], sizes = [2, 32], strides = [1, 1]} : vector<2x128xf32> to vector<2x32xf32>
    %77 = arith.negf %76 : vector<2x32xf32>
    %78 = math.exp %77 : vector<2x32xf32>
    %cst_22 = arith.constant 1.000000e+00 : f32
    %79 = vector.broadcast %cst_22 : f32 to vector<2x32xf32>
    %80 = arith.addf %79, %78 : vector<2x32xf32>
    %81 = arith.divf %79, %80 : vector<2x32xf32>
    %82 = vector.extract_strided_slice %69 {offsets = [0, 64], sizes = [2, 32], strides = [1, 1]} : vector<2x128xf32> to vector<2x32xf32>
    %83 = math.tanh %82 : vector<2x32xf32>
    %84 = vector.extract_strided_slice %69 {offsets = [0, 96], sizes = [2, 32], strides = [1, 1]} : vector<2x128xf32> to vector<2x32xf32>
    %85 = arith.negf %84 : vector<2x32xf32>
    %86 = math.exp %85 : vector<2x32xf32>
    %cst_23 = arith.constant 1.000000e+00 : f32
    %87 = vector.broadcast %cst_23 : f32 to vector<2x32xf32>
    %88 = arith.addf %87, %86 : vector<2x32xf32>
    %89 = arith.divf %87, %88 : vector<2x32xf32>
    %90 = arith.mulf %81, %63 : vector<2x32xf32>
    %91 = arith.mulf %75, %83 : vector<2x32xf32>
    %92 = arith.addf %90, %91 : vector<2x32xf32>
    %93 = math.tanh %92 : vector<2x32xf32>
    %94 = arith.mulf %89, %93 : vector<2x32xf32>
    %c4 = arith.constant 4 : index
    %c0_24 = arith.constant 0 : index
    %95 = vector.load %arg10[%c4, %c0_24] : memref<16x32xf32, #tpu.memory_space<vmem>>, vector<2x32xf32>
    tpu.vector_store %arg10[%c4, %c0_24], %94 {strides = array<i32>} : memref<16x32xf32, #tpu.memory_space<vmem>>, vector<2x32xf32>,
    %96 = vector.extract_strided_slice %6 {offsets = [6, 0], sizes = [2, 128], strides = [1, 1]} : vector<16x128xf32> to vector<2x128xf32>
    %cst_25 = arith.constant dense<0.000000e+00> : vector<2x128xf32>
    %97 = tpu.matmul %94, %2, %cst_25 {dimension_numbers = #tpu.dot_dimension_numbers<[1], [0], [0], [1], [0, 0, 1, 1], [], []>} : vector<2x32xf32>, vector<32x128xf32>, vector<2x128xf32> -> vector<2x128xf32>
    %98 = arith.addf %96, %97 : vector<2x128xf32>
    %99 = vector.extract_strided_slice %98 {offsets = [0, 0], sizes = [2, 32], strides = [1, 1]} : vector<2x128xf32> to vector<2x32xf32>
    %100 = arith.negf %99 : vector<2x32xf32>
    %101 = math.exp %100 : vector<2x32xf32>
    %cst_26 = arith.constant 1.000000e+00 : f32
    %102 = vector.broadcast %cst_26 : f32 to vector<2x32xf32>
    %103 = arith.addf %102, %101 : vector<2x32xf32>
    %104 = arith.divf %102, %103 : vector<2x32xf32>
    %105 = vector.extract_strided_slice %98 {offsets = [0, 32], sizes = [2, 32], strides = [1, 1]} : vector<2x128xf32> to vector<2x32xf32>
    %106 = arith.negf %105 : vector<2x32xf32>
    %107 = math.exp %106 : vector<2x32xf32>
    %cst_27 = arith.constant 1.000000e+00 : f32
    %108 = vector.broadcast %cst_27 : f32 to vector<2x32xf32>
    %109 = arith.addf %108, %107 : vector<2x32xf32>
    %110 = arith.divf %108, %109 : vector<2x32xf32>
    %111 = vector.extract_strided_slice %98 {offsets = [0, 64], sizes = [2, 32], strides = [1, 1]} : vector<2x128xf32> to vector<2x32xf32>
    %112 = math.tanh %111 : vector<2x32xf32>
    %113 = vector.extract_strided_slice %98 {offsets = [0, 96], sizes = [2, 32], strides = [1, 1]} : vector<2x128xf32> to vector<2x32xf32>
    %114 = arith.negf %113 : vector<2x32xf32>
    %115 = math.exp %114 : vector<2x32xf32>
    %cst_28 = arith.constant 1.000000e+00 : f32
    %116 = vector.broadcast %cst_28 : f32 to vector<2x32xf32>
    %117 = arith.addf %116, %115 : vector<2x32xf32>
    %118 = arith.divf %116, %117 : vector<2x32xf32>
    %119 = arith.mulf %110, %92 : vector<2x32xf32>
    %120 = arith.mulf %104, %112 : vector<2x32xf32>
    %121 = arith.addf %119, %120 : vector<2x32xf32>
    %122 = math.tanh %121 : vector<2x32xf32>
    %123 = arith.mulf %118, %122 : vector<2x32xf32>
    %c6 = arith.constant 6 : index
    %c0_29 = arith.constant 0 : index
    %124 = vector.load %arg10[%c6, %c0_29] : memref<16x32xf32, #tpu.memory_space<vmem>>, vector<2x32xf32>
    tpu.vector_store %arg10[%c6, %c0_29], %123 {strides = array<i32>} : memref<16x32xf32, #tpu.memory_space<vmem>>, vector<2x32xf32>,
    %125 = vector.extract_strided_slice %6 {offsets = [8, 0], sizes = [2, 128], strides = [1, 1]} : vector<16x128xf32> to vector<2x128xf32>
    %cst_30 = arith.constant dense<0.000000e+00> : vector<2x128xf32>
    %126 = tpu.matmul %123, %2, %cst_30 {dimension_numbers = #tpu.dot_dimension_numbers<[1], [0], [0], [1], [0, 0, 1, 1], [], []>} : vector<2x32xf32>, vector<32x128xf32>, vector<2x128xf32> -> vector<2x128xf32>
    %127 = arith.addf %125, %126 : vector<2x128xf32>
    %128 = vector.extract_strided_slice %127 {offsets = [0, 0], sizes = [2, 32], strides = [1, 1]} : vector<2x128xf32> to vector<2x32xf32>
    %129 = arith.negf %128 : vector<2x32xf32>
    %130 = math.exp %129 : vector<2x32xf32>
    %cst_31 = arith.constant 1.000000e+00 : f32
    %131 = vector.broadcast %cst_31 : f32 to vector<2x32xf32>
    %132 = arith.addf %131, %130 : vector<2x32xf32>
    %133 = arith.divf %131, %132 : vector<2x32xf32>
    %134 = vector.extract_strided_slice %127 {offsets = [0, 32], sizes = [2, 32], strides = [1, 1]} : vector<2x128xf32> to vector<2x32xf32>
    %135 = arith.negf %134 : vector<2x32xf32>
    %136 = math.exp %135 : vector<2x32xf32>
    %cst_32 = arith.constant 1.000000e+00 : f32
    %137 = vector.broadcast %cst_32 : f32 to vector<2x32xf32>
    %138 = arith.addf %137, %136 : vector<2x32xf32>
    %139 = arith.divf %137, %138 : vector<2x32xf32>
    %140 = vector.extract_strided_slice %127 {offsets = [0, 64], sizes = [2, 32], strides = [1, 1]} : vector<2x128xf32> to vector<2x32xf32>
    %141 = math.tanh %140 : vector<2x32xf32>
    %142 = vector.extract_strided_slice %127 {offsets = [0, 96], sizes = [2, 32], strides = [1, 1]} : vector<2x128xf32> to vector<2x32xf32>
    %143 = arith.negf %142 : vector<2x32xf32>
    %144 = math.exp %143 : vector<2x32xf32>
    %cst_33 = arith.constant 1.000000e+00 : f32
    %145 = vector.broadcast %cst_33 : f32 to vector<2x32xf32>
    %146 = arith.addf %145, %144 : vector<2x32xf32>
    %147 = arith.divf %145, %146 : vector<2x32xf32>
    %148 = arith.mulf %139, %121 : vector<2x32xf32>
    %149 = arith.mulf %133, %141 : vector<2x32xf32>
    %150 = arith.addf %148, %149 : vector<2x32xf32>
    %151 = math.tanh %150 : vector<2x32xf32>
    %152 = arith.mulf %147, %151 : vector<2x32xf32>
    %c8 = arith.constant 8 : index
    %c0_34 = arith.constant 0 : index
    %153 = vector.load %arg10[%c8, %c0_34] : memref<16x32xf32, #tpu.memory_space<vmem>>, vector<2x32xf32>
    tpu.vector_store %arg10[%c8, %c0_34], %152 {strides = array<i32>} : memref<16x32xf32, #tpu.memory_space<vmem>>, vector<2x32xf32>,
    %154 = vector.extract_strided_slice %6 {offsets = [10, 0], sizes = [2, 128], strides = [1, 1]} : vector<16x128xf32> to vector<2x128xf32>
    %cst_35 = arith.constant dense<0.000000e+00> : vector<2x128xf32>
    %155 = tpu.matmul %152, %2, %cst_35 {dimension_numbers = #tpu.dot_dimension_numbers<[1], [0], [0], [1], [0, 0, 1, 1], [], []>} : vector<2x32xf32>, vector<32x128xf32>, vector<2x128xf32> -> vector<2x128xf32>
    %156 = arith.addf %154, %155 : vector<2x128xf32>
    %157 = vector.extract_strided_slice %156 {offsets = [0, 0], sizes = [2, 32], strides = [1, 1]} : vector<2x128xf32> to vector<2x32xf32>
    %158 = arith.negf %157 : vector<2x32xf32>
    %159 = math.exp %158 : vector<2x32xf32>
    %cst_36 = arith.constant 1.000000e+00 : f32
    %160 = vector.broadcast %cst_36 : f32 to vector<2x32xf32>
    %161 = arith.addf %160, %159 : vector<2x32xf32>
    %162 = arith.divf %160, %161 : vector<2x32xf32>
    %163 = vector.extract_strided_slice %156 {offsets = [0, 32], sizes = [2, 32], strides = [1, 1]} : vector<2x128xf32> to vector<2x32xf32>
    %164 = arith.negf %163 : vector<2x32xf32>
    %165 = math.exp %164 : vector<2x32xf32>
    %cst_37 = arith.constant 1.000000e+00 : f32
    %166 = vector.broadcast %cst_37 : f32 to vector<2x32xf32>
    %167 = arith.addf %166, %165 : vector<2x32xf32>
    %168 = arith.divf %166, %167 : vector<2x32xf32>
    %169 = vector.extract_strided_slice %156 {offsets = [0, 64], sizes = [2, 32], strides = [1, 1]} : vector<2x128xf32> to vector<2x32xf32>
    %170 = math.tanh %169 : vector<2x32xf32>
    %171 = vector.extract_strided_slice %156 {offsets = [0, 96], sizes = [2, 32], strides = [1, 1]} : vector<2x128xf32> to vector<2x32xf32>
    %172 = arith.negf %171 : vector<2x32xf32>
    %173 = math.exp %172 : vector<2x32xf32>
    %cst_38 = arith.constant 1.000000e+00 : f32
    %174 = vector.broadcast %cst_38 : f32 to vector<2x32xf32>
    %175 = arith.addf %174, %173 : vector<2x32xf32>
    %176 = arith.divf %174, %175 : vector<2x32xf32>
    %177 = arith.mulf %168, %150 : vector<2x32xf32>
    %178 = arith.mulf %162, %170 : vector<2x32xf32>
    %179 = arith.addf %177, %178 : vector<2x32xf32>
    %180 = math.tanh %179 : vector<2x32xf32>
    %181 = arith.mulf %176, %180 : vector<2x32xf32>
    %c10 = arith.constant 10 : index
    %c0_39 = arith.constant 0 : index
    %182 = vector.load %arg10[%c10, %c0_39] : memref<16x32xf32, #tpu.memory_space<vmem>>, vector<2x32xf32>
    tpu.vector_store %arg10[%c10, %c0_39], %181 {strides = array<i32>} : memref<16x32xf32, #tpu.memory_space<vmem>>, vector<2x32xf32>,
    %183 = vector.extract_strided_slice %6 {offsets = [12, 0], sizes = [2, 128], strides = [1, 1]} : vector<16x128xf32> to vector<2x128xf32>
    %cst_40 = arith.constant dense<0.000000e+00> : vector<2x128xf32>
    %184 = tpu.matmul %181, %2, %cst_40 {dimension_numbers = #tpu.dot_dimension_numbers<[1], [0], [0], [1], [0, 0, 1, 1], [], []>} : vector<2x32xf32>, vector<32x128xf32>, vector<2x128xf32> -> vector<2x128xf32>
    %185 = arith.addf %183, %184 : vector<2x128xf32>
    %186 = vector.extract_strided_slice %185 {offsets = [0, 0], sizes = [2, 32], strides = [1, 1]} : vector<2x128xf32> to vector<2x32xf32>
    %187 = arith.negf %186 : vector<2x32xf32>
    %188 = math.exp %187 : vector<2x32xf32>
    %cst_41 = arith.constant 1.000000e+00 : f32
    %189 = vector.broadcast %cst_41 : f32 to vector<2x32xf32>
    %190 = arith.addf %189, %188 : vector<2x32xf32>
    %191 = arith.divf %189, %190 : vector<2x32xf32>
    %192 = vector.extract_strided_slice %185 {offsets = [0, 32], sizes = [2, 32], strides = [1, 1]} : vector<2x128xf32> to vector<2x32xf32>
    %193 = arith.negf %192 : vector<2x32xf32>
    %194 = math.exp %193 : vector<2x32xf32>
    %cst_42 = arith.constant 1.000000e+00 : f32
    %195 = vector.broadcast %cst_42 : f32 to vector<2x32xf32>
    %196 = arith.addf %195, %194 : vector<2x32xf32>
    %197 = arith.divf %195, %196 : vector<2x32xf32>
    %198 = vector.extract_strided_slice %185 {offsets = [0, 64], sizes = [2, 32], strides = [1, 1]} : vector<2x128xf32> to vector<2x32xf32>
    %199 = math.tanh %198 : vector<2x32xf32>
    %200 = vector.extract_strided_slice %185 {offsets = [0, 96], sizes = [2, 32], strides = [1, 1]} : vector<2x128xf32> to vector<2x32xf32>
    %201 = arith.negf %200 : vector<2x32xf32>
    %202 = math.exp %201 : vector<2x32xf32>
    %cst_43 = arith.constant 1.000000e+00 : f32
    %203 = vector.broadcast %cst_43 : f32 to vector<2x32xf32>
    %204 = arith.addf %203, %202 : vector<2x32xf32>
    %205 = arith.divf %203, %204 : vector<2x32xf32>
    %206 = arith.mulf %197, %179 : vector<2x32xf32>
    %207 = arith.mulf %191, %199 : vector<2x32xf32>
    %208 = arith.addf %206, %207 : vector<2x32xf32>
    %209 = math.tanh %208 : vector<2x32xf32>
    %210 = arith.mulf %205, %209 : vector<2x32xf32>
    %c12 = arith.constant 12 : index
    %c0_44 = arith.constant 0 : index
    %211 = vector.load %arg10[%c12, %c0_44] : memref<16x32xf32, #tpu.memory_space<vmem>>, vector<2x32xf32>
    tpu.vector_store %arg10[%c12, %c0_44], %210 {strides = array<i32>} : memref<16x32xf32, #tpu.memory_space<vmem>>, vector<2x32xf32>,
    %212 = vector.extract_strided_slice %6 {offsets = [14, 0], sizes = [2, 128], strides = [1, 1]} : vector<16x128xf32> to vector<2x128xf32>
    %cst_45 = arith.constant dense<0.000000e+00> : vector<2x128xf32>
    %213 = tpu.matmul %210, %2, %cst_45 {dimension_numbers = #tpu.dot_dimension_numbers<[1], [0], [0], [1], [0, 0, 1, 1], [], []>} : vector<2x32xf32>, vector<32x128xf32>, vector<2x128xf32> -> vector<2x128xf32>
    %214 = arith.addf %212, %213 : vector<2x128xf32>
    %215 = vector.extract_strided_slice %214 {offsets = [0, 0], sizes = [2, 32], strides = [1, 1]} : vector<2x128xf32> to vector<2x32xf32>
    %216 = arith.negf %215 : vector<2x32xf32>
    %217 = math.exp %216 : vector<2x32xf32>
    %cst_46 = arith.constant 1.000000e+00 : f32
    %218 = vector.broadcast %cst_46 : f32 to vector<2x32xf32>
    %219 = arith.addf %218, %217 : vector<2x32xf32>
    %220 = arith.divf %218, %219 : vector<2x32xf32>
    %221 = vector.extract_strided_slice %214 {offsets = [0, 32], sizes = [2, 32], strides = [1, 1]} : vector<2x128xf32> to vector<2x32xf32>
    %222 = arith.negf %221 : vector<2x32xf32>
    %223 = math.exp %222 : vector<2x32xf32>
    %cst_47 = arith.constant 1.000000e+00 : f32
    %224 = vector.broadcast %cst_47 : f32 to vector<2x32xf32>
    %225 = arith.addf %224, %223 : vector<2x32xf32>
    %226 = arith.divf %224, %225 : vector<2x32xf32>
    %227 = vector.extract_strided_slice %214 {offsets = [0, 64], sizes = [2, 32], strides = [1, 1]} : vector<2x128xf32> to vector<2x32xf32>
    %228 = math.tanh %227 : vector<2x32xf32>
    %229 = vector.extract_strided_slice %214 {offsets = [0, 96], sizes = [2, 32], strides = [1, 1]} : vector<2x128xf32> to vector<2x32xf32>
    %230 = arith.negf %229 : vector<2x32xf32>
    %231 = math.exp %230 : vector<2x32xf32>
    %cst_48 = arith.constant 1.000000e+00 : f32
    %232 = vector.broadcast %cst_48 : f32 to vector<2x32xf32>
    %233 = arith.addf %232, %231 : vector<2x32xf32>
    %234 = arith.divf %232, %233 : vector<2x32xf32>
    %235 = arith.mulf %226, %208 : vector<2x32xf32>
    %236 = arith.mulf %220, %228 : vector<2x32xf32>
    %237 = arith.addf %235, %236 : vector<2x32xf32>
    %238 = math.tanh %237 : vector<2x32xf32>
    %239 = arith.mulf %234, %238 : vector<2x32xf32>
    %c14 = arith.constant 14 : index
    %c0_49 = arith.constant 0 : index
    %240 = vector.load %arg10[%c14, %c0_49] : memref<16x32xf32, #tpu.memory_space<vmem>>, vector<2x32xf32>
    tpu.vector_store %arg10[%c14, %c0_49], %239 {strides = array<i32>} : memref<16x32xf32, #tpu.memory_space<vmem>>, vector<2x32xf32>,
    %c0_50 = arith.constant 0 : index
    %c0_51 = arith.constant 0 : index
    %241 = vector.load %arg10[%c0_50, %c0_51] : memref<16x32xf32, #tpu.memory_space<vmem>>, vector<16x32xf32>
    %c0_52 = arith.constant 0 : index
    %c0_53 = arith.constant 0 : index
    %242 = vector.load %arg4[%c0_52, %c0_53] : memref<32x128xf32, #tpu.memory_space<vmem>>, vector<32x128xf32>
    %c0_54 = arith.constant 0 : index
    %c0_55 = arith.constant 0 : index
    %243 = vector.load %arg5[%c0_54, %c0_55] : memref<32x128xf32, #tpu.memory_space<vmem>>, vector<32x128xf32>
    %c0_56 = arith.constant 0 : index
    %c0_57 = arith.constant 0 : index
    %244 = vector.load %arg6[%c0_56, %c0_57] : memref<1x128xf32, #tpu.memory_space<vmem>>, vector<1x128xf32>
    %cst_58 = arith.constant dense<0.000000e+00> : vector<16x128xf32>
    %245 = tpu.matmul %241, %242, %cst_58 {dimension_numbers = #tpu.dot_dimension_numbers<[1], [0], [0], [1], [0, 0, 1, 1], [], []>} : vector<16x32xf32>, vector<32x128xf32>, vector<16x128xf32> -> vector<16x128xf32>
    %246 = vector.broadcast %244 : vector<1x128xf32> to vector<16x128xf32>
    %247 = arith.addf %245, %246 : vector<16x128xf32>
    %cst_59 = arith.constant 0.000000e+00 : f32
    %248 = vector.broadcast %cst_59 : f32 to vector<2x32xf32>
    %cst_60 = arith.constant 0.000000e+00 : f32
    %249 = vector.broadcast %cst_60 : f32 to vector<2x32xf32>
    %250 = vector.extract_strided_slice %247 {offsets = [0, 0], sizes = [2, 128], strides = [1, 1]} : vector<16x128xf32> to vector<2x128xf32>
    %cst_61 = arith.constant dense<0.000000e+00> : vector<2x128xf32>
    %251 = tpu.matmul %248, %243, %cst_61 {dimension_numbers = #tpu.dot_dimension_numbers<[1], [0], [0], [1], [0, 0, 1, 1], [], []>} : vector<2x32xf32>, vector<32x128xf32>, vector<2x128xf32> -> vector<2x128xf32>
    %252 = arith.addf %250, %251 : vector<2x128xf32>
    %253 = vector.extract_strided_slice %252 {offsets = [0, 0], sizes = [2, 32], strides = [1, 1]} : vector<2x128xf32> to vector<2x32xf32>
    %254 = arith.negf %253 : vector<2x32xf32>
    %255 = math.exp %254 : vector<2x32xf32>
    %cst_62 = arith.constant 1.000000e+00 : f32
    %256 = vector.broadcast %cst_62 : f32 to vector<2x32xf32>
    %257 = arith.addf %256, %255 : vector<2x32xf32>
    %258 = arith.divf %256, %257 : vector<2x32xf32>
    %259 = vector.extract_strided_slice %252 {offsets = [0, 32], sizes = [2, 32], strides = [1, 1]} : vector<2x128xf32> to vector<2x32xf32>
    %260 = arith.negf %259 : vector<2x32xf32>
    %261 = math.exp %260 : vector<2x32xf32>
    %cst_63 = arith.constant 1.000000e+00 : f32
    %262 = vector.broadcast %cst_63 : f32 to vector<2x32xf32>
    %263 = arith.addf %262, %261 : vector<2x32xf32>
    %264 = arith.divf %262, %263 : vector<2x32xf32>
    %265 = vector.extract_strided_slice %252 {offsets = [0, 64], sizes = [2, 32], strides = [1, 1]} : vector<2x128xf32> to vector<2x32xf32>
    %266 = math.tanh %265 : vector<2x32xf32>
    %267 = vector.extract_strided_slice %252 {offsets = [0, 96], sizes = [2, 32], strides = [1, 1]} : vector<2x128xf32> to vector<2x32xf32>
    %268 = arith.negf %267 : vector<2x32xf32>
    %269 = math.exp %268 : vector<2x32xf32>
    %cst_64 = arith.constant 1.000000e+00 : f32
    %270 = vector.broadcast %cst_64 : f32 to vector<2x32xf32>
    %271 = arith.addf %270, %269 : vector<2x32xf32>
    %272 = arith.divf %270, %271 : vector<2x32xf32>
    %273 = arith.mulf %264, %249 : vector<2x32xf32>
    %274 = arith.mulf %258, %266 : vector<2x32xf32>
    %275 = arith.addf %273, %274 : vector<2x32xf32>
    %276 = math.tanh %275 : vector<2x32xf32>
    %277 = arith.mulf %272, %276 : vector<2x32xf32>
    %c0_65 = arith.constant 0 : index
    %c0_66 = arith.constant 0 : index
    %278 = vector.load %arg10[%c0_65, %c0_66] : memref<16x32xf32, #tpu.memory_space<vmem>>, vector<2x32xf32>
    tpu.vector_store %arg10[%c0_65, %c0_66], %277 {strides = array<i32>} : memref<16x32xf32, #tpu.memory_space<vmem>>, vector<2x32xf32>,
    %279 = vector.extract_strided_slice %247 {offsets = [2, 0], sizes = [2, 128], strides = [1, 1]} : vector<16x128xf32> to vector<2x128xf32>
    %cst_67 = arith.constant dense<0.000000e+00> : vector<2x128xf32>
    %280 = tpu.matmul %277, %243, %cst_67 {dimension_numbers = #tpu.dot_dimension_numbers<[1], [0], [0], [1], [0, 0, 1, 1], [], []>} : vector<2x32xf32>, vector<32x128xf32>, vector<2x128xf32> -> vector<2x128xf32>
    %281 = arith.addf %279, %280 : vector<2x128xf32>
    %282 = vector.extract_strided_slice %281 {offsets = [0, 0], sizes = [2, 32], strides = [1, 1]} : vector<2x128xf32> to vector<2x32xf32>
    %283 = arith.negf %282 : vector<2x32xf32>
    %284 = math.exp %283 : vector<2x32xf32>
    %cst_68 = arith.constant 1.000000e+00 : f32
    %285 = vector.broadcast %cst_68 : f32 to vector<2x32xf32>
    %286 = arith.addf %285, %284 : vector<2x32xf32>
    %287 = arith.divf %285, %286 : vector<2x32xf32>
    %288 = vector.extract_strided_slice %281 {offsets = [0, 32], sizes = [2, 32], strides = [1, 1]} : vector<2x128xf32> to vector<2x32xf32>
    %289 = arith.negf %288 : vector<2x32xf32>
    %290 = math.exp %289 : vector<2x32xf32>
    %cst_69 = arith.constant 1.000000e+00 : f32
    %291 = vector.broadcast %cst_69 : f32 to vector<2x32xf32>
    %292 = arith.addf %291, %290 : vector<2x32xf32>
    %293 = arith.divf %291, %292 : vector<2x32xf32>
    %294 = vector.extract_strided_slice %281 {offsets = [0, 64], sizes = [2, 32], strides = [1, 1]} : vector<2x128xf32> to vector<2x32xf32>
    %295 = math.tanh %294 : vector<2x32xf32>
    %296 = vector.extract_strided_slice %281 {offsets = [0, 96], sizes = [2, 32], strides = [1, 1]} : vector<2x128xf32> to vector<2x32xf32>
    %297 = arith.negf %296 : vector<2x32xf32>
    %298 = math.exp %297 : vector<2x32xf32>
    %cst_70 = arith.constant 1.000000e+00 : f32
    %299 = vector.broadcast %cst_70 : f32 to vector<2x32xf32>
    %300 = arith.addf %299, %298 : vector<2x32xf32>
    %301 = arith.divf %299, %300 : vector<2x32xf32>
    %302 = arith.mulf %293, %275 : vector<2x32xf32>
    %303 = arith.mulf %287, %295 : vector<2x32xf32>
    %304 = arith.addf %302, %303 : vector<2x32xf32>
    %305 = math.tanh %304 : vector<2x32xf32>
    %306 = arith.mulf %301, %305 : vector<2x32xf32>
    %c2_71 = arith.constant 2 : index
    %c0_72 = arith.constant 0 : index
    %307 = vector.load %arg10[%c2_71, %c0_72] : memref<16x32xf32, #tpu.memory_space<vmem>>, vector<2x32xf32>
    tpu.vector_store %arg10[%c2_71, %c0_72], %306 {strides = array<i32>} : memref<16x32xf32, #tpu.memory_space<vmem>>, vector<2x32xf32>,
    %308 = vector.extract_strided_slice %247 {offsets = [4, 0], sizes = [2, 128], strides = [1, 1]} : vector<16x128xf32> to vector<2x128xf32>
    %cst_73 = arith.constant dense<0.000000e+00> : vector<2x128xf32>
    %309 = tpu.matmul %306, %243, %cst_73 {dimension_numbers = #tpu.dot_dimension_numbers<[1], [0], [0], [1], [0, 0, 1, 1], [], []>} : vector<2x32xf32>, vector<32x128xf32>, vector<2x128xf32> -> vector<2x128xf32>
    %310 = arith.addf %308, %309 : vector<2x128xf32>
    %311 = vector.extract_strided_slice %310 {offsets = [0, 0], sizes = [2, 32], strides = [1, 1]} : vector<2x128xf32> to vector<2x32xf32>
    %312 = arith.negf %311 : vector<2x32xf32>
    %313 = math.exp %312 : vector<2x32xf32>
    %cst_74 = arith.constant 1.000000e+00 : f32
    %314 = vector.broadcast %cst_74 : f32 to vector<2x32xf32>
    %315 = arith.addf %314, %313 : vector<2x32xf32>
    %316 = arith.divf %314, %315 : vector<2x32xf32>
    %317 = vector.extract_strided_slice %310 {offsets = [0, 32], sizes = [2, 32], strides = [1, 1]} : vector<2x128xf32> to vector<2x32xf32>
    %318 = arith.negf %317 : vector<2x32xf32>
    %319 = math.exp %318 : vector<2x32xf32>
    %cst_75 = arith.constant 1.000000e+00 : f32
    %320 = vector.broadcast %cst_75 : f32 to vector<2x32xf32>
    %321 = arith.addf %320, %319 : vector<2x32xf32>
    %322 = arith.divf %320, %321 : vector<2x32xf32>
    %323 = vector.extract_strided_slice %310 {offsets = [0, 64], sizes = [2, 32], strides = [1, 1]} : vector<2x128xf32> to vector<2x32xf32>
    %324 = math.tanh %323 : vector<2x32xf32>
    %325 = vector.extract_strided_slice %310 {offsets = [0, 96], sizes = [2, 32], strides = [1, 1]} : vector<2x128xf32> to vector<2x32xf32>
    %326 = arith.negf %325 : vector<2x32xf32>
    %327 = math.exp %326 : vector<2x32xf32>
    %cst_76 = arith.constant 1.000000e+00 : f32
    %328 = vector.broadcast %cst_76 : f32 to vector<2x32xf32>
    %329 = arith.addf %328, %327 : vector<2x32xf32>
    %330 = arith.divf %328, %329 : vector<2x32xf32>
    %331 = arith.mulf %322, %304 : vector<2x32xf32>
    %332 = arith.mulf %316, %324 : vector<2x32xf32>
    %333 = arith.addf %331, %332 : vector<2x32xf32>
    %334 = math.tanh %333 : vector<2x32xf32>
    %335 = arith.mulf %330, %334 : vector<2x32xf32>
    %c4_77 = arith.constant 4 : index
    %c0_78 = arith.constant 0 : index
    %336 = vector.load %arg10[%c4_77, %c0_78] : memref<16x32xf32, #tpu.memory_space<vmem>>, vector<2x32xf32>
    tpu.vector_store %arg10[%c4_77, %c0_78], %335 {strides = array<i32>} : memref<16x32xf32, #tpu.memory_space<vmem>>, vector<2x32xf32>,
    %337 = vector.extract_strided_slice %247 {offsets = [6, 0], sizes = [2, 128], strides = [1, 1]} : vector<16x128xf32> to vector<2x128xf32>
    %cst_79 = arith.constant dense<0.000000e+00> : vector<2x128xf32>
    %338 = tpu.matmul %335, %243, %cst_79 {dimension_numbers = #tpu.dot_dimension_numbers<[1], [0], [0], [1], [0, 0, 1, 1], [], []>} : vector<2x32xf32>, vector<32x128xf32>, vector<2x128xf32> -> vector<2x128xf32>
    %339 = arith.addf %337, %338 : vector<2x128xf32>
    %340 = vector.extract_strided_slice %339 {offsets = [0, 0], sizes = [2, 32], strides = [1, 1]} : vector<2x128xf32> to vector<2x32xf32>
    %341 = arith.negf %340 : vector<2x32xf32>
    %342 = math.exp %341 : vector<2x32xf32>
    %cst_80 = arith.constant 1.000000e+00 : f32
    %343 = vector.broadcast %cst_80 : f32 to vector<2x32xf32>
    %344 = arith.addf %343, %342 : vector<2x32xf32>
    %345 = arith.divf %343, %344 : vector<2x32xf32>
    %346 = vector.extract_strided_slice %339 {offsets = [0, 32], sizes = [2, 32], strides = [1, 1]} : vector<2x128xf32> to vector<2x32xf32>
    %347 = arith.negf %346 : vector<2x32xf32>
    %348 = math.exp %347 : vector<2x32xf32>
    %cst_81 = arith.constant 1.000000e+00 : f32
    %349 = vector.broadcast %cst_81 : f32 to vector<2x32xf32>
    %350 = arith.addf %349, %348 : vector<2x32xf32>
    %351 = arith.divf %349, %350 : vector<2x32xf32>
    %352 = vector.extract_strided_slice %339 {offsets = [0, 64], sizes = [2, 32], strides = [1, 1]} : vector<2x128xf32> to vector<2x32xf32>
    %353 = math.tanh %352 : vector<2x32xf32>
    %354 = vector.extract_strided_slice %339 {offsets = [0, 96], sizes = [2, 32], strides = [1, 1]} : vector<2x128xf32> to vector<2x32xf32>
    %355 = arith.negf %354 : vector<2x32xf32>
    %356 = math.exp %355 : vector<2x32xf32>
    %cst_82 = arith.constant 1.000000e+00 : f32
    %357 = vector.broadcast %cst_82 : f32 to vector<2x32xf32>
    %358 = arith.addf %357, %356 : vector<2x32xf32>
    %359 = arith.divf %357, %358 : vector<2x32xf32>
    %360 = arith.mulf %351, %333 : vector<2x32xf32>
    %361 = arith.mulf %345, %353 : vector<2x32xf32>
    %362 = arith.addf %360, %361 : vector<2x32xf32>
    %363 = math.tanh %362 : vector<2x32xf32>
    %364 = arith.mulf %359, %363 : vector<2x32xf32>
    %c6_83 = arith.constant 6 : index
    %c0_84 = arith.constant 0 : index
    %365 = vector.load %arg10[%c6_83, %c0_84] : memref<16x32xf32, #tpu.memory_space<vmem>>, vector<2x32xf32>
    tpu.vector_store %arg10[%c6_83, %c0_84], %364 {strides = array<i32>} : memref<16x32xf32, #tpu.memory_space<vmem>>, vector<2x32xf32>,
    %366 = vector.extract_strided_slice %247 {offsets = [8, 0], sizes = [2, 128], strides = [1, 1]} : vector<16x128xf32> to vector<2x128xf32>
    %cst_85 = arith.constant dense<0.000000e+00> : vector<2x128xf32>
    %367 = tpu.matmul %364, %243, %cst_85 {dimension_numbers = #tpu.dot_dimension_numbers<[1], [0], [0], [1], [0, 0, 1, 1], [], []>} : vector<2x32xf32>, vector<32x128xf32>, vector<2x128xf32> -> vector<2x128xf32>
    %368 = arith.addf %366, %367 : vector<2x128xf32>
    %369 = vector.extract_strided_slice %368 {offsets = [0, 0], sizes = [2, 32], strides = [1, 1]} : vector<2x128xf32> to vector<2x32xf32>
    %370 = arith.negf %369 : vector<2x32xf32>
    %371 = math.exp %370 : vector<2x32xf32>
    %cst_86 = arith.constant 1.000000e+00 : f32
    %372 = vector.broadcast %cst_86 : f32 to vector<2x32xf32>
    %373 = arith.addf %372, %371 : vector<2x32xf32>
    %374 = arith.divf %372, %373 : vector<2x32xf32>
    %375 = vector.extract_strided_slice %368 {offsets = [0, 32], sizes = [2, 32], strides = [1, 1]} : vector<2x128xf32> to vector<2x32xf32>
    %376 = arith.negf %375 : vector<2x32xf32>
    %377 = math.exp %376 : vector<2x32xf32>
    %cst_87 = arith.constant 1.000000e+00 : f32
    %378 = vector.broadcast %cst_87 : f32 to vector<2x32xf32>
    %379 = arith.addf %378, %377 : vector<2x32xf32>
    %380 = arith.divf %378, %379 : vector<2x32xf32>
    %381 = vector.extract_strided_slice %368 {offsets = [0, 64], sizes = [2, 32], strides = [1, 1]} : vector<2x128xf32> to vector<2x32xf32>
    %382 = math.tanh %381 : vector<2x32xf32>
    %383 = vector.extract_strided_slice %368 {offsets = [0, 96], sizes = [2, 32], strides = [1, 1]} : vector<2x128xf32> to vector<2x32xf32>
    %384 = arith.negf %383 : vector<2x32xf32>
    %385 = math.exp %384 : vector<2x32xf32>
    %cst_88 = arith.constant 1.000000e+00 : f32
    %386 = vector.broadcast %cst_88 : f32 to vector<2x32xf32>
    %387 = arith.addf %386, %385 : vector<2x32xf32>
    %388 = arith.divf %386, %387 : vector<2x32xf32>
    %389 = arith.mulf %380, %362 : vector<2x32xf32>
    %390 = arith.mulf %374, %382 : vector<2x32xf32>
    %391 = arith.addf %389, %390 : vector<2x32xf32>
    %392 = math.tanh %391 : vector<2x32xf32>
    %393 = arith.mulf %388, %392 : vector<2x32xf32>
    %c8_89 = arith.constant 8 : index
    %c0_90 = arith.constant 0 : index
    %394 = vector.load %arg10[%c8_89, %c0_90] : memref<16x32xf32, #tpu.memory_space<vmem>>, vector<2x32xf32>
    tpu.vector_store %arg10[%c8_89, %c0_90], %393 {strides = array<i32>} : memref<16x32xf32, #tpu.memory_space<vmem>>, vector<2x32xf32>,
    %395 = vector.extract_strided_slice %247 {offsets = [10, 0], sizes = [2, 128], strides = [1, 1]} : vector<16x128xf32> to vector<2x128xf32>
    %cst_91 = arith.constant dense<0.000000e+00> : vector<2x128xf32>
    %396 = tpu.matmul %393, %243, %cst_91 {dimension_numbers = #tpu.dot_dimension_numbers<[1], [0], [0], [1], [0, 0, 1, 1], [], []>} : vector<2x32xf32>, vector<32x128xf32>, vector<2x128xf32> -> vector<2x128xf32>
    %397 = arith.addf %395, %396 : vector<2x128xf32>
    %398 = vector.extract_strided_slice %397 {offsets = [0, 0], sizes = [2, 32], strides = [1, 1]} : vector<2x128xf32> to vector<2x32xf32>
    %399 = arith.negf %398 : vector<2x32xf32>
    %400 = math.exp %399 : vector<2x32xf32>
    %cst_92 = arith.constant 1.000000e+00 : f32
    %401 = vector.broadcast %cst_92 : f32 to vector<2x32xf32>
    %402 = arith.addf %401, %400 : vector<2x32xf32>
    %403 = arith.divf %401, %402 : vector<2x32xf32>
    %404 = vector.extract_strided_slice %397 {offsets = [0, 32], sizes = [2, 32], strides = [1, 1]} : vector<2x128xf32> to vector<2x32xf32>
    %405 = arith.negf %404 : vector<2x32xf32>
    %406 = math.exp %405 : vector<2x32xf32>
    %cst_93 = arith.constant 1.000000e+00 : f32
    %407 = vector.broadcast %cst_93 : f32 to vector<2x32xf32>
    %408 = arith.addf %407, %406 : vector<2x32xf32>
    %409 = arith.divf %407, %408 : vector<2x32xf32>
    %410 = vector.extract_strided_slice %397 {offsets = [0, 64], sizes = [2, 32], strides = [1, 1]} : vector<2x128xf32> to vector<2x32xf32>
    %411 = math.tanh %410 : vector<2x32xf32>
    %412 = vector.extract_strided_slice %397 {offsets = [0, 96], sizes = [2, 32], strides = [1, 1]} : vector<2x128xf32> to vector<2x32xf32>
    %413 = arith.negf %412 : vector<2x32xf32>
    %414 = math.exp %413 : vector<2x32xf32>
    %cst_94 = arith.constant 1.000000e+00 : f32
    %415 = vector.broadcast %cst_94 : f32 to vector<2x32xf32>
    %416 = arith.addf %415, %414 : vector<2x32xf32>
    %417 = arith.divf %415, %416 : vector<2x32xf32>
    %418 = arith.mulf %409, %391 : vector<2x32xf32>
    %419 = arith.mulf %403, %411 : vector<2x32xf32>
    %420 = arith.addf %418, %419 : vector<2x32xf32>
    %421 = math.tanh %420 : vector<2x32xf32>
    %422 = arith.mulf %417, %421 : vector<2x32xf32>
    %c10_95 = arith.constant 10 : index
    %c0_96 = arith.constant 0 : index
    %423 = vector.load %arg10[%c10_95, %c0_96] : memref<16x32xf32, #tpu.memory_space<vmem>>, vector<2x32xf32>
    tpu.vector_store %arg10[%c10_95, %c0_96], %422 {strides = array<i32>} : memref<16x32xf32, #tpu.memory_space<vmem>>, vector<2x32xf32>,
    %424 = vector.extract_strided_slice %247 {offsets = [12, 0], sizes = [2, 128], strides = [1, 1]} : vector<16x128xf32> to vector<2x128xf32>
    %cst_97 = arith.constant dense<0.000000e+00> : vector<2x128xf32>
    %425 = tpu.matmul %422, %243, %cst_97 {dimension_numbers = #tpu.dot_dimension_numbers<[1], [0], [0], [1], [0, 0, 1, 1], [], []>} : vector<2x32xf32>, vector<32x128xf32>, vector<2x128xf32> -> vector<2x128xf32>
    %426 = arith.addf %424, %425 : vector<2x128xf32>
    %427 = vector.extract_strided_slice %426 {offsets = [0, 0], sizes = [2, 32], strides = [1, 1]} : vector<2x128xf32> to vector<2x32xf32>
    %428 = arith.negf %427 : vector<2x32xf32>
    %429 = math.exp %428 : vector<2x32xf32>
    %cst_98 = arith.constant 1.000000e+00 : f32
    %430 = vector.broadcast %cst_98 : f32 to vector<2x32xf32>
    %431 = arith.addf %430, %429 : vector<2x32xf32>
    %432 = arith.divf %430, %431 : vector<2x32xf32>
    %433 = vector.extract_strided_slice %426 {offsets = [0, 32], sizes = [2, 32], strides = [1, 1]} : vector<2x128xf32> to vector<2x32xf32>
    %434 = arith.negf %433 : vector<2x32xf32>
    %435 = math.exp %434 : vector<2x32xf32>
    %cst_99 = arith.constant 1.000000e+00 : f32
    %436 = vector.broadcast %cst_99 : f32 to vector<2x32xf32>
    %437 = arith.addf %436, %435 : vector<2x32xf32>
    %438 = arith.divf %436, %437 : vector<2x32xf32>
    %439 = vector.extract_strided_slice %426 {offsets = [0, 64], sizes = [2, 32], strides = [1, 1]} : vector<2x128xf32> to vector<2x32xf32>
    %440 = math.tanh %439 : vector<2x32xf32>
    %441 = vector.extract_strided_slice %426 {offsets = [0, 96], sizes = [2, 32], strides = [1, 1]} : vector<2x128xf32> to vector<2x32xf32>
    %442 = arith.negf %441 : vector<2x32xf32>
    %443 = math.exp %442 : vector<2x32xf32>
    %cst_100 = arith.constant 1.000000e+00 : f32
    %444 = vector.broadcast %cst_100 : f32 to vector<2x32xf32>
    %445 = arith.addf %444, %443 : vector<2x32xf32>
    %446 = arith.divf %444, %445 : vector<2x32xf32>
    %447 = arith.mulf %438, %420 : vector<2x32xf32>
    %448 = arith.mulf %432, %440 : vector<2x32xf32>
    %449 = arith.addf %447, %448 : vector<2x32xf32>
    %450 = math.tanh %449 : vector<2x32xf32>
    %451 = arith.mulf %446, %450 : vector<2x32xf32>
    %c12_101 = arith.constant 12 : index
    %c0_102 = arith.constant 0 : index
    %452 = vector.load %arg10[%c12_101, %c0_102] : memref<16x32xf32, #tpu.memory_space<vmem>>, vector<2x32xf32>
    tpu.vector_store %arg10[%c12_101, %c0_102], %451 {strides = array<i32>} : memref<16x32xf32, #tpu.memory_space<vmem>>, vector<2x32xf32>,
    %453 = vector.extract_strided_slice %247 {offsets = [14, 0], sizes = [2, 128], strides = [1, 1]} : vector<16x128xf32> to vector<2x128xf32>
    %cst_103 = arith.constant dense<0.000000e+00> : vector<2x128xf32>
    %454 = tpu.matmul %451, %243, %cst_103 {dimension_numbers = #tpu.dot_dimension_numbers<[1], [0], [0], [1], [0, 0, 1, 1], [], []>} : vector<2x32xf32>, vector<32x128xf32>, vector<2x128xf32> -> vector<2x128xf32>
    %455 = arith.addf %453, %454 : vector<2x128xf32>
    %456 = vector.extract_strided_slice %455 {offsets = [0, 0], sizes = [2, 32], strides = [1, 1]} : vector<2x128xf32> to vector<2x32xf32>
    %457 = arith.negf %456 : vector<2x32xf32>
    %458 = math.exp %457 : vector<2x32xf32>
    %cst_104 = arith.constant 1.000000e+00 : f32
    %459 = vector.broadcast %cst_104 : f32 to vector<2x32xf32>
    %460 = arith.addf %459, %458 : vector<2x32xf32>
    %461 = arith.divf %459, %460 : vector<2x32xf32>
    %462 = vector.extract_strided_slice %455 {offsets = [0, 32], sizes = [2, 32], strides = [1, 1]} : vector<2x128xf32> to vector<2x32xf32>
    %463 = arith.negf %462 : vector<2x32xf32>
    %464 = math.exp %463 : vector<2x32xf32>
    %cst_105 = arith.constant 1.000000e+00 : f32
    %465 = vector.broadcast %cst_105 : f32 to vector<2x32xf32>
    %466 = arith.addf %465, %464 : vector<2x32xf32>
    %467 = arith.divf %465, %466 : vector<2x32xf32>
    %468 = vector.extract_strided_slice %455 {offsets = [0, 64], sizes = [2, 32], strides = [1, 1]} : vector<2x128xf32> to vector<2x32xf32>
    %469 = math.tanh %468 : vector<2x32xf32>
    %470 = vector.extract_strided_slice %455 {offsets = [0, 96], sizes = [2, 32], strides = [1, 1]} : vector<2x128xf32> to vector<2x32xf32>
    %471 = arith.negf %470 : vector<2x32xf32>
    %472 = math.exp %471 : vector<2x32xf32>
    %cst_106 = arith.constant 1.000000e+00 : f32
    %473 = vector.broadcast %cst_106 : f32 to vector<2x32xf32>
    %474 = arith.addf %473, %472 : vector<2x32xf32>
    %475 = arith.divf %473, %474 : vector<2x32xf32>
    %476 = arith.mulf %467, %449 : vector<2x32xf32>
    %477 = arith.mulf %461, %469 : vector<2x32xf32>
    %478 = arith.addf %476, %477 : vector<2x32xf32>
    %479 = math.tanh %478 : vector<2x32xf32>
    %480 = arith.mulf %475, %479 : vector<2x32xf32>
    %c14_107 = arith.constant 14 : index
    %c0_108 = arith.constant 0 : index
    %481 = vector.load %arg10[%c14_107, %c0_108] : memref<16x32xf32, #tpu.memory_space<vmem>>, vector<2x32xf32>
    tpu.vector_store %arg10[%c14_107, %c0_108], %480 {strides = array<i32>} : memref<16x32xf32, #tpu.memory_space<vmem>>, vector<2x32xf32>,
    %c0_109 = arith.constant 0 : index
    %c0_110 = arith.constant 0 : index
    %482 = vector.load %arg10[%c0_109, %c0_110] : memref<16x32xf32, #tpu.memory_space<vmem>>, vector<16x32xf32>
    %c0_111 = arith.constant 0 : index
    %c0_112 = arith.constant 0 : index
    %483 = vector.load %arg7[%c0_111, %c0_112] : memref<32x16xf32, #tpu.memory_space<vmem>>, vector<32x16xf32>
    %cst_113 = arith.constant dense<0.000000e+00> : vector<16x16xf32>
    %484 = tpu.matmul %482, %483, %cst_113 {dimension_numbers = #tpu.dot_dimension_numbers<[1], [0], [0], [1], [0, 0, 1, 1], [], []>} : vector<16x32xf32>, vector<32x16xf32>, vector<16x16xf32> -> vector<16x16xf32>
    %c0_114 = arith.constant 0 : index
    %c0_115 = arith.constant 0 : index
    %485 = vector.load %arg8[%c0_114, %c0_115] : memref<1x16xf32, #tpu.memory_space<vmem>>, vector<1x16xf32>
    %486 = vector.broadcast %485 : vector<1x16xf32> to vector<16x16xf32>
    %487 = arith.addf %484, %486 : vector<16x16xf32>
    %c0_116 = arith.constant 0 : index
    %c0_117 = arith.constant 0 : index
    %488 = vector.load %arg9[%c0_116, %c0_117] : memref<16x16xf32, #tpu.memory_space<vmem>>, vector<16x16xf32>
    tpu.vector_store %arg9[%c0_116, %c0_117], %487 {strides = array<i32>} : memref<16x16xf32, #tpu.memory_space<vmem>>, vector<16x16xf32>,
    return
  }
}

</mosaic_0001>

<llo_original>
// kernel: lstm_generator_forward.1
$region0: #{lstm_generator_forward.1}
  #allocation0 [shape = 'u32[]', space=smem, size = 0x4, offset = 0x4, fixed_abs, tag = 'smem constant byte address 0x4 - core index']
  #allocation1 [shape = 'u32[144,128]{1,0:T(1,128)}', space=vmem, size = 0x12000, scoped, tag = 'internal scratch']
  #allocation2 [shape = 'f32[16,32]{1,0:T(8,128)}', space=vmem, size = 0x2000, scoped, tag = 'scratch operand']
  %s0 = inlined_call_operand.vmem [shape: f32[16,4], index: 0, kind: input, shape index: {}]
  %s1 = inlined_call_operand.hbm [shape: f32[4,128], index: 1, kind: input, shape index: {}]
  %s2 = inlined_call_operand.vmem [shape: f32[32,128], index: 2, kind: input, shape index: {}]
  %s3 = inlined_call_operand.vmem [shape: f32[1,128], index: 3, kind: input, shape index: {}]
  %s4 = inlined_call_operand.vmem [shape: f32[32,128], index: 4, kind: input, shape index: {}]
  %s5 = inlined_call_operand.vmem [shape: f32[32,128], index: 5, kind: input, shape index: {}]
  %s6 = inlined_call_operand.vmem [shape: f32[1,128], index: 6, kind: input, shape index: {}]
  %s7 = inlined_call_operand.vmem [shape: f32[32,16], index: 7, kind: input, shape index: {}]
  %s8 = inlined_call_operand.hbm [shape: f32[1,16], index: 8, kind: input, shape index: {}]
  %s9 = inlined_call_operand.vmem [shape: f32[16,16], index: 9, kind: output, shape index: {}]
  %s10 = sld [smem:[#allocation0]]
  $region54: #{lstm_generator_forward.1} parent=0
    _
  %s12 = ssub.s32 1, %s10
  %s13 = scalar_select 0, %s12, %s10
  $region1: #{lstm_generator_forward.1} parent=0
    #allocation3 [shape = 'u8[2048]{0}', space=vmem, size = 0x800, scoped, tag = 'input window, operand 1, single buffered']
    #allocation4 [shape = 's32[1]{0}', space=sflag, size = 0x4, scoped, tag = 'scoped memory for lstm_generator_forward.1']
    #allocation5 [shape = 'u8[512]{0}', space=vmem, size = 0x400, scoped, tag = 'input window, operand 8, single buffered']
    #allocation6 [shape = 's32[1]{0}', space=sflag, size = 0x4, scoped, tag = 'scoped memory for lstm_generator_forward.1']
    %14 = vsyncpa [#allocation4], 0
    %15 = vsyncpa [#allocation6], 0
    // Predicated region
    $region2: #{lstm_generator_forward.1} parent=1 // pred_check
      _
    $region3: #{lstm_generator_forward.1} parent=1 // pred_check_branch
      %17 = sbr.rel (0) target = $region5
    $region4: #{lstm_generator_forward.1} parent=1 // pred_region
      _
    $region5: #{lstm_generator_forward.1} parent=1 // pred_fallthru
      _
    // Predicated region
    $region6: #{lstm_generator_forward.1} parent=1 // pred_check
      _
    $region7: #{lstm_generator_forward.1} parent=1 // pred_check_branch
      %19 = sbr.rel (0) target = $region9
    $region8: #{lstm_generator_forward.1} parent=1 // pred_region
      %s21 = ssub.s32 64, 64
      %22 = vsyncadd [#allocation4], %s21
      %s24 = sshll.u32 [#allocation3], 4
      %s25 = int_to_ptr.vmem [resolvable:$true] %s24
      %27 = dma.hbm_to_vmem [thread:$0]  %s1, 64, %s25, [#allocation4]
    $region9: #{lstm_generator_forward.1} parent=1 // pred_fallthru
      _
    // Predicated region
    $region10: #{lstm_generator_forward.1} parent=1 // pred_check
      _
    $region11: #{lstm_generator_forward.1} parent=1 // pred_check_branch
      %29 = sbr.rel (0) target = $region13
    $region12: #{lstm_generator_forward.1} parent=1 // pred_region
      _
    $region13: #{lstm_generator_forward.1} parent=1 // pred_fallthru
      _
    // Predicated region
    $region14: #{lstm_generator_forward.1} parent=1 // pred_check
      _
    $region15: #{lstm_generator_forward.1} parent=1 // pred_check_branch
      %31 = sbr.rel (0) target = $region17
    $region16: #{lstm_generator_forward.1} parent=1 // pred_region
      _
    $region17: #{lstm_generator_forward.1} parent=1 // pred_fallthru
      _
    // Predicated region
    $region18: #{lstm_generator_forward.1} parent=1 // pred_check
      _
    $region19: #{lstm_generator_forward.1} parent=1 // pred_check_branch
      %33 = sbr.rel (0) target = $region21
    $region20: #{lstm_generator_forward.1} parent=1 // pred_region
      _
    $region21: #{lstm_generator_forward.1} parent=1 // pred_fallthru
      _
    // Predicated region
    $region22: #{lstm_generator_forward.1} parent=1 // pred_check
      _
    $region23: #{lstm_generator_forward.1} parent=1 // pred_check_branch
      %35 = sbr.rel (0) target = $region25
    $region24: #{lstm_generator_forward.1} parent=1 // pred_region
      _
    $region25: #{lstm_generator_forward.1} parent=1 // pred_fallthru
      _
    // Predicated region
    $region26: #{lstm_generator_forward.1} parent=1 // pred_check
      _
    $region27: #{lstm_generator_forward.1} parent=1 // pred_check_branch
      %37 = sbr.rel (0) target = $region29
    $region28: #{lstm_generator_forward.1} parent=1 // pred_region
      _
    $region29: #{lstm_generator_forward.1} parent=1 // pred_fallthru
      _
    // Predicated region
    $region30: #{lstm_generator_forward.1} parent=1 // pred_check
      _
    $region31: #{lstm_generator_forward.1} parent=1 // pred_check_branch
      %39 = sbr.rel (0) target = $region33
    $region32: #{lstm_generator_forward.1} parent=1 // pred_region
      _
    $region33: #{lstm_generator_forward.1} parent=1 // pred_fallthru
      _
    // Predicated region
    $region34: #{lstm_generator_forward.1} parent=1 // pred_check
      _
    $region35: #{lstm_generator_forward.1} parent=1 // pred_check_branch
      %41 = sbr.rel (0) target = $region37
    $region36: #{lstm_generator_forward.1} parent=1 // pred_region
      %s43 = ssub.s32 16, 16
      %44 = vsyncadd [#allocation6], %s43
      %s46 = sshll.u32 [#allocation5], 4
      %s47 = int_to_ptr.vmem [resolvable:$true] %s46
      %49 = dma.hbm_to_vmem [thread:$0]  %s8, 16, %s47, [#allocation6]
    $region37: #{lstm_generator_forward.1} parent=1 // pred_fallthru
      _
    // Predicated region
    $region38: #{lstm_generator_forward.1} parent=1 // pred_check
      _
    $region39: #{lstm_generator_forward.1} parent=1 // pred_check_branch
      %51 = sbr.rel (0) target = $region41
    $region40: #{lstm_generator_forward.1} parent=1 // pred_region
      %52 = dma.done [#allocation4], 64
    $region41: #{lstm_generator_forward.1} parent=1 // pred_fallthru
      _
    // Predicated region
    $region42: #{lstm_generator_forward.1} parent=1 // pred_check
      _
    $region43: #{lstm_generator_forward.1} parent=1 // pred_check_branch
      %54 = sbr.rel (0) target = $region45
    $region44: #{lstm_generator_forward.1} parent=1 // pred_region
      %55 = dma.done [#allocation6], 16
    $region45: #{lstm_generator_forward.1} parent=1 // pred_fallthru
      _
    %v56 = vld [vmem:[%s0] sm:$0xff]
    %v57 = vld [vmem:[%s0 + $0x8] sm:$0xff]
    %v58 = vld [vmem:[#allocation3] sm:$0xf]
    %v59 = vld [vmem:[%s2] sm:$0xff]
    %v60 = vld [vmem:[%s2 + $0x8] sm:$0xff]
    %v61 = vld [vmem:[%s2 + $0x10] sm:$0xff]
    %v62 = vld [vmem:[%s2 + $0x18] sm:$0xff]
    %v63 = vld [vmem:[%s3] sm:$0x1]
    %v65 = vlaneseq
    %v66 = vshrl.u32 %v65, 7
    %v67 = vsub.s32 0, %v66
    %v68 = vrot.slane %v63, %v67
    %vm70 = vcmask 31744
    %v72 = vsel %vm70, %v56, 0
    %v75 = vsel %vm70, %v57, 0
    %vm77 = vcmask 1043456
    %v79 = vsel %vm77, %v58, 0
    %81 = vmatprep.subr.mxu0 0.0
    %82 = vmatpush1.msra.mxu0 %v79
    %83 = vmatprep.subr.mxu0 0.0
    %84 = vmatpush1.msra.mxu0 0.0
    %85 = vmatprep.subr.mxu0 0.0
    %86 = vmatpush1.msra.mxu0 0.0
    %87 = vmatprep.subr.mxu0 0.0
    %88 = vmatpush1.msra.mxu0 0.0
    %89 = vmatprep.subr.mxu0 0.0
    %90 = vmatpush1.msra.mxu0 0.0
    %91 = vmatprep.subr.mxu0 0.0
    %92 = vmatpush1.msra.mxu0 0.0
    %93 = vmatprep.subr.mxu0 0.0
    %94 = vmatpush1.msra.mxu0 0.0
    %95 = vmatprep.subr.mxu0 0.0
    %96 = vmatpush1.msra.mxu0 0.0
    %97 = vmatprep.subr.mxu0 0.0
    %98 = vmatpush1.msra.mxu0 0.0
    %99 = vmatprep.subr.mxu0 0.0
    %100 = vmatpush1.msra.mxu0 0.0
    %101 = vmatprep.subr.mxu0 0.0
    %102 = vmatpush1.msra.mxu0 0.0
    %103 = vmatprep.subr.mxu0 0.0
    %104 = vmatpush1.msra.mxu0 0.0
    %105 = vmatprep.subr.mxu0 0.0
    %106 = vmatpush1.msra.mxu0 0.0
    %107 = vmatprep.subr.mxu0 0.0
    %108 = vmatpush1.msra.mxu0 0.0
    %109 = vmatprep.subr.mxu0 0.0
    %110 = vmatpush1.msra.mxu0 0.0
    %111 = vmatprep.subr.mxu0 0.0
    %112 = vmatpush1.msra.mxu0 0.0
    %113 = vmatprep.subr.mxu0 0.0
    %114 = vmatpush1.msra.mxu0 0.0
    %115 = vmatprep.subr.mxu0 0.0
    %116 = vmatpush1.msra.mxu0 0.0
    %117 = vmatprep.subr.mxu0 0.0
    %118 = vmatpush1.msra.mxu0 0.0
    %119 = vmatprep.subr.mxu0 0.0
    %120 = vmatpush1.msra.mxu0 0.0
    %121 = vmatprep.subr.mxu0 0.0
    %122 = vmatpush1.msra.mxu0 0.0
    %123 = vmatprep.subr.mxu0 0.0
    %124 = vmatpush1.msra.mxu0 0.0
    %125 = vmatprep.subr.mxu0 0.0
    %126 = vmatpush1.msra.mxu0 0.0
    %127 = vmatprep.subr.mxu0 0.0
    %128 = vmatpush1.msra.mxu0 0.0
    %129 = vmatprep.subr.mxu0 0.0
    %130 = vmatpush1.msra.mxu0 0.0
    %131 = vmatprep.subr.mxu0 0.0
    %132 = vmatpush1.msra.mxu0 0.0
    %133 = vmatprep.subr.mxu0 0.0
    %134 = vmatpush1.msra.mxu0 0.0
    %135 = vmatprep.subr.mxu0 0.0
    %136 = vmatpush1.msra.mxu0 0.0
    %137 = vmatprep.subr.mxu0 0.0
    %138 = vmatpush1.msra.mxu0 0.0
    %139 = vmatprep.subr.mxu0 0.0
    %140 = vmatpush1.msra.mxu0 0.0
    %141 = vmatprep.subr.mxu0 0.0
    %142 = vmatpush1.msra.mxu0 0.0
    %143 = vmatprep.subr.mxu0 0.0
    %144 = vmatpush1.msra.mxu0 0.0
    %145 = vmatprep.mubr.f32.mxu0 0.0
    %146 = vmatmul.mubr.f32.gmra.mrb[0].mxu0 %v72
    %v147 = vpop.f32.mrb[0].mxu0
    %v148 = vadd.f32 %v68, %v147
    %v149 = vpop.f32.mrb[0].mxu0
    %150 = vmatprep.mubr.f32.mxu0 0.0
    %151 = vmatmul.mubr.f32.gmra.mrb[0].mxu0 %v75
    %v152 = vpop.f32.mrb[0].mxu0
    %v153 = vadd.f32 %v68, %v152
    %v154 = vpop.f32.mrb[0].mxu0
    %155 = vdwg.mxu0
    %vm156 = vcmask 261120
    %v158 = vsel %vm156, 0.0, 0
    %160 = vmatprep.subr.mxu0 0.0
    %161 = vmatpush1.msra.mxu0 %v59
    %162 = vmatprep.subr.mxu0 0.0
    %163 = vmatpush1.msra.mxu0 %v60
    %164 = vmatprep.subr.mxu0 0.0
    %165 = vmatpush1.msra.mxu0 %v61
    %166 = vmatprep.subr.mxu0 0.0
    %167 = vmatpush1.msra.mxu0 %v62
    %168 = vmatprep.subr.mxu0 0.0
    %169 = vmatpush1.msra.mxu0 0.0
    %170 = vmatprep.subr.mxu0 0.0
    %171 = vmatpush1.msra.mxu0 0.0
    %172 = vmatprep.subr.mxu0 0.0
    %173 = vmatpush1.msra.mxu0 0.0
    %174 = vmatprep.subr.mxu0 0.0
    %175 = vmatpush1.msra.mxu0 0.0
    %176 = vmatprep.subr.mxu0 0.0
    %177 = vmatpush1.msra.mxu0 0.0
    %178 = vmatprep.subr.mxu0 0.0
    %179 = vmatpush1.msra.mxu0 0.0
    %180 = vmatprep.subr.mxu0 0.0
    %181 = vmatpush1.msra.mxu0 0.0
    %182 = vmatprep.subr.mxu0 0.0
    %183 = vmatpush1.msra.mxu0 0.0
    %184 = vmatprep.subr.mxu0 0.0
    %185 = vmatpush1.msra.mxu0 0.0
    %186 = vmatprep.subr.mxu0 0.0
    %187 = vmatpush1.msra.mxu0 0.0
    %188 = vmatprep.subr.mxu0 0.0
    %189 = vmatpush1.msra.mxu0 0.0
    %190 = vmatprep.subr.mxu0 0.0
    %191 = vmatpush1.msra.mxu0 0.0
    %192 = vmatprep.subr.mxu0 0.0
    %193 = vmatpush1.msra.mxu0 0.0
    %194 = vmatprep.subr.mxu0 0.0
    %195 = vmatpush1.msra.mxu0 0.0
    %196 = vmatprep.subr.mxu0 0.0
    %197 = vmatpush1.msra.mxu0 0.0
    %198 = vmatprep.subr.mxu0 0.0
    %199 = vmatpush1.msra.mxu0 0.0
    %200 = vmatprep.subr.mxu0 0.0
    %201 = vmatpush1.msra.mxu0 0.0
    %202 = vmatprep.subr.mxu0 0.0
    %203 = vmatpush1.msra.mxu0 0.0
    %204 = vmatprep.subr.mxu0 0.0
    %205 = vmatpush1.msra.mxu0 0.0
    %206 = vmatprep.subr.mxu0 0.0
    %207 = vmatpush1.msra.mxu0 0.0
    %208 = vmatprep.subr.mxu0 0.0
    %209 = vmatpush1.msra.mxu0 0.0
    %210 = vmatprep.subr.mxu0 0.0
    %211 = vmatpush1.msra.mxu0 0.0
    %212 = vmatprep.subr.mxu0 0.0
    %213 = vmatpush1.msra.mxu0 0.0
    %214 = vmatprep.subr.mxu0 0.0
    %215 = vmatpush1.msra.mxu0 0.0
    %216 = vmatprep.subr.mxu0 0.0
    %217 = vmatpush1.msra.mxu0 0.0
    %218 = vmatprep.subr.mxu0 0.0
    %219 = vmatpush1.msra.mxu0 0.0
    %220 = vmatprep.subr.mxu0 0.0
    %221 = vmatpush1.msra.mxu0 0.0
    %222 = vmatprep.subr.mxu0 0.0
    %223 = vmatpush1.msra.mxu0 0.0
    %224 = vmatprep.mubr.f32.mxu0 0.0
    %225 = vmatmul.mubr.f32.gmra.mrb[0].mxu0 %v158
    %v226 = vpop.f32.mrb[0].mxu0
    %v227 = vadd.f32 0.0, %v226
    %v228 = vpop.f32.mrb[0].mxu0
    %229 = vdwg.mxu0
    %v230 = vadd.f32 %v148, %v227
    %v231 = vxor.u32 %v230, 2147483648
    %v232 = vmul.f32 %v231, 1.442695
    %v233 = vpow.pop %v232
    %v234 = vadd.f32 %v233, 1.0
    %v235 = vrcp.pop %v234
    %v236 = vmul.f32 1.0, %v235
    %v237 = vtanh.pop %v230
    %v238 = vmul.f32 %v236, 0.0
    %240 = vrot.lane.b32.xlu0 %v237, 64
    %v241 = vpop.permute.xlu0 %240
    %v243 = vmul.f32 %v236, %v241
    %245 = vrot.lane.b32.xlu0 %v243, 32
    %v246 = vpop.permute.xlu0 %245
    %v248 = vadd.f32 %v238, %v246
    %v249 = vtanh.pop %v248
    %251 = vrot.lane.b32.xlu0 %v249, 64
    %v252 = vpop.permute.xlu0 %251
    %v254 = vmul.f32 %v236, %v252
    %256 = vrot.lane.b32.xlu0 %v254, 32
    %v257 = vpop.permute.xlu0 %256
    %vm259 = vcmask 254976
    %260 = vst.msk [vmem:[#allocation2] sm:$0x3] %vm259, %v257
    %v261 = vsel %vm156, %v257, 0
    %263 = vmatprep.subr.mxu0 0.0
    %264 = vmatpush1.msra.mxu0 %v59
    %265 = vmatprep.subr.mxu0 0.0
    %266 = vmatpush1.msra.mxu0 %v60
    %267 = vmatprep.subr.mxu0 0.0
    %268 = vmatpush1.msra.mxu0 %v61
    %269 = vmatprep.subr.mxu0 0.0
    %270 = vmatpush1.msra.mxu0 %v62
    %271 = vmatprep.subr.mxu0 0.0
    %272 = vmatpush1.msra.mxu0 0.0
    %273 = vmatprep.subr.mxu0 0.0
    %274 = vmatpush1.msra.mxu0 0.0
    %275 = vmatprep.subr.mxu0 0.0
    %276 = vmatpush1.msra.mxu0 0.0
    %277 = vmatprep.subr.mxu0 0.0
    %278 = vmatpush1.msra.mxu0 0.0
    %279 = vmatprep.subr.mxu0 0.0
    %280 = vmatpush1.msra.mxu0 0.0
    %281 = vmatprep.subr.mxu0 0.0
    %282 = vmatpush1.msra.mxu0 0.0
    %283 = vmatprep.subr.mxu0 0.0
    %284 = vmatpush1.msra.mxu0 0.0
    %285 = vmatprep.subr.mxu0 0.0
    %286 = vmatpush1.msra.mxu0 0.0
    %287 = vmatprep.subr.mxu0 0.0
    %288 = vmatpush1.msra.mxu0 0.0
    %289 = vmatprep.subr.mxu0 0.0
    %290 = vmatpush1.msra.mxu0 0.0
    %291 = vmatprep.subr.mxu0 0.0
    %292 = vmatpush1.msra.mxu0 0.0
    %293 = vmatprep.subr.mxu0 0.0
    %294 = vmatpush1.msra.mxu0 0.0
    %295 = vmatprep.subr.mxu0 0.0
    %296 = vmatpush1.msra.mxu0 0.0
    %297 = vmatprep.subr.mxu0 0.0
    %298 = vmatpush1.msra.mxu0 0.0
    %299 = vmatprep.subr.mxu0 0.0
    %300 = vmatpush1.msra.mxu0 0.0
    %301 = vmatprep.subr.mxu0 0.0
    %302 = vmatpush1.msra.mxu0 0.0
    %303 = vmatprep.subr.mxu0 0.0
    %304 = vmatpush1.msra.mxu0 0.0
    %305 = vmatprep.subr.mxu0 0.0
    %306 = vmatpush1.msra.mxu0 0.0
    %307 = vmatprep.subr.mxu0 0.0
    %308 = vmatpush1.msra.mxu0 0.0
    %309 = vmatprep.subr.mxu0 0.0
    %310 = vmatpush1.msra.mxu0 0.0
    %311 = vmatprep.subr.mxu0 0.0
    %312 = vmatpush1.msra.mxu0 0.0
    %313 = vmatprep.subr.mxu0 0.0
    %314 = vmatpush1.msra.mxu0 0.0
    %315 = vmatprep.subr.mxu0 0.0
    %316 = vmatpush1.msra.mxu0 0.0
    %317 = vmatprep.subr.mxu0 0.0
    %318 = vmatpush1.msra.mxu0 0.0
    %319 = vmatprep.subr.mxu0 0.0
    %320 = vmatpush1.msra.mxu0 0.0
    %321 = vmatprep.subr.mxu0 0.0
    %322 = vmatpush1.msra.mxu0 0.0
    %323 = vmatprep.subr.mxu0 0.0
    %324 = vmatpush1.msra.mxu0 0.0
    %325 = vmatprep.subr.mxu0 0.0
    %326 = vmatpush1.msra.mxu0 0.0
    %327 = vmatprep.mubr.f32.mxu0 0.0
    %328 = vmatmul.mubr.f32.gmra.mrb[0].mxu0 %v261
    %v329 = vpop.f32.mrb[0].mxu0
    %v330 = vadd.f32 0.0, %v329
    %v331 = vpop.f32.mrb[0].mxu0
    %332 = vdwg.mxu0
    %v334 = vrot.slane %v330, 6
    %v336 = vadd.f32 %v148, %v334
    %v337 = vxor.u32 %v336, 2147483648
    %v338 = vmul.f32 %v337, 1.442695
    %v339 = vpow.pop %v338
    %v340 = vadd.f32 %v339, 1.0
    %v341 = vrcp.pop %v340
    %v342 = vmul.f32 1.0, %v341
    %v343 = vtanh.pop %v336
    %v345 = vrot.slane %v248, 6
    %v347 = vmul.f32 %v342, %v345
    %349 = vrot.lane.b32.xlu0 %v343, 64
    %v350 = vpop.permute.xlu0 %349
    %v352 = vmul.f32 %v342, %v350
    %354 = vrot.lane.b32.xlu0 %v352, 32
    %v355 = vpop.permute.xlu0 %354
    %v357 = vadd.f32 %v347, %v355
    %v358 = vtanh.pop %v357
    %360 = vrot.lane.b32.xlu0 %v358, 64
    %v361 = vpop.permute.xlu0 %360
    %v363 = vmul.f32 %v342, %v361
    %365 = vrot.lane.b32.xlu0 %v363, 32
    %v366 = vpop.permute.xlu0 %365
    %vm368 = vcmask 257026
    %369 = vst.msk [vmem:[#allocation2] sm:$0xc] %vm368, %v366
    %v370 = vrot.slane %v363, 2
    %371 = vrot.lane.b32.xlu0 %v370, 32
    %v372 = vpop.permute.xlu0 %371
    %v373 = vsel %vm156, %v372, 0
    %375 = vmatprep.subr.mxu0 0.0
    %376 = vmatpush1.msra.mxu0 %v59
    %377 = vmatprep.subr.mxu0 0.0
    %378 = vmatpush1.msra.mxu0 %v60
    %379 = vmatprep.subr.mxu0 0.0
    %380 = vmatpush1.msra.mxu0 %v61
    %381 = vmatprep.subr.mxu0 0.0
    %382 = vmatpush1.msra.mxu0 %v62
    %383 = vmatprep.subr.mxu0 0.0
    %384 = vmatpush1.msra.mxu0 0.0
    %385 = vmatprep.subr.mxu0 0.0
    %386 = vmatpush1.msra.mxu0 0.0
    %387 = vmatprep.subr.mxu0 0.0
    %388 = vmatpush1.msra.mxu0 0.0
    %389 = vmatprep.subr.mxu0 0.0
    %390 = vmatpush1.msra.mxu0 0.0
    %391 = vmatprep.subr.mxu0 0.0
    %392 = vmatpush1.msra.mxu0 0.0
    %393 = vmatprep.subr.mxu0 0.0
    %394 = vmatpush1.msra.mxu0 0.0
    %395 = vmatprep.subr.mxu0 0.0
    %396 = vmatpush1.msra.mxu0 0.0
    %397 = vmatprep.subr.mxu0 0.0
    %398 = vmatpush1.msra.mxu0 0.0
    %399 = vmatprep.subr.mxu0 0.0
    %400 = vmatpush1.msra.mxu0 0.0
    %401 = vmatprep.subr.mxu0 0.0
    %402 = vmatpush1.msra.mxu0 0.0
    %403 = vmatprep.subr.mxu0 0.0
    %404 = vmatpush1.msra.mxu0 0.0
    %405 = vmatprep.subr.mxu0 0.0
    %406 = vmatpush1.msra.mxu0 0.0
    %407 = vmatprep.subr.mxu0 0.0
    %408 = vmatpush1.msra.mxu0 0.0
    %409 = vmatprep.subr.mxu0 0.0
    %410 = vmatpush1.msra.mxu0 0.0
    %411 = vmatprep.subr.mxu0 0.0
    %412 = vmatpush1.msra.mxu0 0.0
    %413 = vmatprep.subr.mxu0 0.0
    %414 = vmatpush1.msra.mxu0 0.0
    %415 = vmatprep.subr.mxu0 0.0
    %416 = vmatpush1.msra.mxu0 0.0
    %417 = vmatprep.subr.mxu0 0.0
    %418 = vmatpush1.msra.mxu0 0.0
    %419 = vmatprep.subr.mxu0 0.0
    %420 = vmatpush1.msra.mxu0 0.0
    %421 = vmatprep.subr.mxu0 0.0
    %422 = vmatpush1.msra.mxu0 0.0
    %423 = vmatprep.subr.mxu0 0.0
    %424 = vmatpush1.msra.mxu0 0.0
    %425 = vmatprep.subr.mxu0 0.0
    %426 = vmatpush1.msra.mxu0 0.0
    %427 = vmatprep.subr.mxu0 0.0
    %428 = vmatpush1.msra.mxu0 0.0
    %429 = vmatprep.subr.mxu0 0.0
    %430 = vmatpush1.msra.mxu0 0.0
    %431 = vmatprep.subr.mxu0 0.0
    %432 = vmatpush1.msra.mxu0 0.0
    %433 = vmatprep.subr.mxu0 0.0
    %434 = vmatpush1.msra.mxu0 0.0
    %435 = vmatprep.subr.mxu0 0.0
    %436 = vmatpush1.msra.mxu0 0.0
    %437 = vmatprep.subr.mxu0 0.0
    %438 = vmatpush1.msra.mxu0 0.0
    %439 = vmatprep.mubr.f32.mxu0 0.0
    %440 = vmatmul.mubr.f32.gmra.mrb[0].mxu0 %v373
    %v441 = vpop.f32.mrb[0].mxu0
    %v442 = vadd.f32 0.0, %v441
    %v443 = vpop.f32.mrb[0].mxu0
    %444 = vdwg.mxu0
    %v446 = vrot.slane %v442, 4
    %v448 = vadd.f32 %v148, %v446
    %v449 = vxor.u32 %v448, 2147483648
    %v450 = vmul.f32 %v449, 1.442695
    %v451 = vpow.pop %v450
    %v452 = vadd.f32 %v451, 1.0
    %v453 = vrcp.pop %v452
    %v454 = vmul.f32 1.0, %v453
    %v455 = vtanh.pop %v448
    %v457 = vrot.slane %v357, 6
    %v459 = vmul.f32 %v454, %v457
    %461 = vrot.lane.b32.xlu0 %v455, 64
    %v462 = vpop.permute.xlu0 %461
    %v464 = vmul.f32 %v454, %v462
    %466 = vrot.lane.b32.xlu0 %v464, 32
    %v467 = vpop.permute.xlu0 %466
    %v469 = vadd.f32 %v459, %v467
    %v470 = vtanh.pop %v469
    %472 = vrot.lane.b32.xlu0 %v470, 64
    %v473 = vpop.permute.xlu0 %472
    %v475 = vmul.f32 %v454, %v473
    %477 = vrot.lane.b32.xlu0 %v475, 32
    %v478 = vpop.permute.xlu0 %477
    %vm480 = vcmask 259076
    %481 = vst.msk [vmem:[#allocation2] sm:$0x30] %vm480, %v478
    %v482 = vrot.slane %v475, 4
    %483 = vrot.lane.b32.xlu0 %v482, 32
    %v484 = vpop.permute.xlu0 %483
    %v485 = vsel %vm156, %v484, 0
    %487 = vmatprep.subr.mxu0 0.0
    %488 = vmatpush1.msra.mxu0 %v59
    %489 = vmatprep.subr.mxu0 0.0
    %490 = vmatpush1.msra.mxu0 %v60
    %491 = vmatprep.subr.mxu0 0.0
    %492 = vmatpush1.msra.mxu0 %v61
    %493 = vmatprep.subr.mxu0 0.0
    %494 = vmatpush1.msra.mxu0 %v62
    %495 = vmatprep.subr.mxu0 0.0
    %496 = vmatpush1.msra.mxu0 0.0
    %497 = vmatprep.subr.mxu0 0.0
    %498 = vmatpush1.msra.mxu0 0.0
    %499 = vmatprep.subr.mxu0 0.0
    %500 = vmatpush1.msra.mxu0 0.0
    %501 = vmatprep.subr.mxu0 0.0
    %502 = vmatpush1.msra.mxu0 0.0
    %503 = vmatprep.subr.mxu0 0.0
    %504 = vmatpush1.msra.mxu0 0.0
    %505 = vmatprep.subr.mxu0 0.0
    %506 = vmatpush1.msra.mxu0 0.0
    %507 = vmatprep.subr.mxu0 0.0
    %508 = vmatpush1.msra.mxu0 0.0
    %509 = vmatprep.subr.mxu0 0.0
    %510 = vmatpush1.msra.mxu0 0.0
    %511 = vmatprep.subr.mxu0 0.0
    %512 = vmatpush1.msra.mxu0 0.0
    %513 = vmatprep.subr.mxu0 0.0
    %514 = vmatpush1.msra.mxu0 0.0
    %515 = vmatprep.subr.mxu0 0.0
    %516 = vmatpush1.msra.mxu0 0.0
    %517 = vmatprep.subr.mxu0 0.0
    %518 = vmatpush1.msra.mxu0 0.0
    %519 = vmatprep.subr.mxu0 0.0
    %520 = vmatpush1.msra.mxu0 0.0
    %521 = vmatprep.subr.mxu0 0.0
    %522 = vmatpush1.msra.mxu0 0.0
    %523 = vmatprep.subr.mxu0 0.0
    %524 = vmatpush1.msra.mxu0 0.0
    %525 = vmatprep.subr.mxu0 0.0
    %526 = vmatpush1.msra.mxu0 0.0
    %527 = vmatprep.subr.mxu0 0.0
    %528 = vmatpush1.msra.mxu0 0.0
    %529 = vmatprep.subr.mxu0 0.0
    %530 = vmatpush1.msra.mxu0 0.0
    %531 = vmatprep.subr.mxu0 0.0
    %532 = vmatpush1.msra.mxu0 0.0
    %533 = vmatprep.subr.mxu0 0.0
    %534 = vmatpush1.msra.mxu0 0.0
    %535 = vmatprep.subr.mxu0 0.0
    %536 = vmatpush1.msra.mxu0 0.0
    %537 = vmatprep.subr.mxu0 0.0
    %538 = vmatpush1.msra.mxu0 0.0
    %539 = vmatprep.subr.mxu0 0.0
    %540 = vmatpush1.msra.mxu0 0.0
    %541 = vmatprep.subr.mxu0 0.0
    %542 = vmatpush1.msra.mxu0 0.0
    %543 = vmatprep.subr.mxu0 0.0
    %544 = vmatpush1.msra.mxu0 0.0
    %545 = vmatprep.subr.mxu0 0.0
    %546 = vmatpush1.msra.mxu0 0.0
    %547 = vmatprep.subr.mxu0 0.0
    %548 = vmatpush1.msra.mxu0 0.0
    %549 = vmatprep.subr.mxu0 0.0
    %550 = vmatpush1.msra.mxu0 0.0
    %551 = vmatprep.mubr.f32.mxu0 0.0
    %552 = vmatmul.mubr.f32.gmra.mrb[0].mxu0 %v485
    %v553 = vpop.f32.mrb[0].mxu0
    %v554 = vadd.f32 0.0, %v553
    %v555 = vpop.f32.mrb[0].mxu0
    %556 = vdwg.mxu0
    %v558 = vrot.slane %v554, 2
    %v560 = vadd.f32 %v148, %v558
    %v561 = vxor.u32 %v560, 2147483648
    %v562 = vmul.f32 %v561, 1.442695
    %v563 = vpow.pop %v562
    %v564 = vadd.f32 %v563, 1.0
    %v565 = vrcp.pop %v564
    %v566 = vmul.f32 1.0, %v565
    %v567 = vtanh.pop %v560
    %v569 = vrot.slane %v469, 6
    %v571 = vmul.f32 %v566, %v569
    %573 = vrot.lane.b32.xlu0 %v567, 64
    %v574 = vpop.permute.xlu0 %573
    %v576 = vmul.f32 %v566, %v574
    %578 = vrot.lane.b32.xlu0 %v576, 32
    %v579 = vpop.permute.xlu0 %578
    %v581 = vadd.f32 %v571, %v579
    %v582 = vtanh.pop %v581
    %584 = vrot.lane.b32.xlu0 %v582, 64
    %v585 = vpop.permute.xlu0 %584
    %v587 = vmul.f32 %v566, %v585
    %589 = vrot.lane.b32.xlu0 %v587, 32
    %v590 = vpop.permute.xlu0 %589
    %vm592 = vcmask 261126
    %593 = vst.msk [vmem:[#allocation2] sm:$0xc0] %vm592, %v590
    %v594 = vrot.slane %v587, 6
    %595 = vrot.lane.b32.xlu0 %v594, 32
    %v596 = vpop.permute.xlu0 %595
    %v597 = vsel %vm156, %v596, 0
    %599 = vmatprep.subr.mxu0 0.0
    %600 = vmatpush1.msra.mxu0 %v59
    %601 = vmatprep.subr.mxu0 0.0
    %602 = vmatpush1.msra.mxu0 %v60
    %603 = vmatprep.subr.mxu0 0.0
    %604 = vmatpush1.msra.mxu0 %v61
    %605 = vmatprep.subr.mxu0 0.0
    %606 = vmatpush1.msra.mxu0 %v62
    %607 = vmatprep.subr.mxu0 0.0
    %608 = vmatpush1.msra.mxu0 0.0
    %609 = vmatprep.subr.mxu0 0.0
    %610 = vmatpush1.msra.mxu0 0.0
    %611 = vmatprep.subr.mxu0 0.0
    %612 = vmatpush1.msra.mxu0 0.0
    %613 = vmatprep.subr.mxu0 0.0
    %614 = vmatpush1.msra.mxu0 0.0
    %615 = vmatprep.subr.mxu0 0.0
    %616 = vmatpush1.msra.mxu0 0.0
    %617 = vmatprep.subr.mxu0 0.0
    %618 = vmatpush1.msra.mxu0 0.0
    %619 = vmatprep.subr.mxu0 0.0
    %620 = vmatpush1.msra.mxu0 0.0
    %621 = vmatprep.subr.mxu0 0.0
    %622 = vmatpush1.msra.mxu0 0.0
    %623 = vmatprep.subr.mxu0 0.0
    %624 = vmatpush1.msra.mxu0 0.0
    %625 = vmatprep.subr.mxu0 0.0
    %626 = vmatpush1.msra.mxu0 0.0
    %627 = vmatprep.subr.mxu0 0.0
    %628 = vmatpush1.msra.mxu0 0.0
    %629 = vmatprep.subr.mxu0 0.0
    %630 = vmatpush1.msra.mxu0 0.0
    %631 = vmatprep.subr.mxu0 0.0
    %632 = vmatpush1.msra.mxu0 0.0
    %633 = vmatprep.subr.mxu0 0.0
    %634 = vmatpush1.msra.mxu0 0.0
    %635 = vmatprep.subr.mxu0 0.0
    %636 = vmatpush1.msra.mxu0 0.0
    %637 = vmatprep.subr.mxu0 0.0
    %638 = vmatpush1.msra.mxu0 0.0
    %639 = vmatprep.subr.mxu0 0.0
    %640 = vmatpush1.msra.mxu0 0.0
    %641 = vmatprep.subr.mxu0 0.0
    %642 = vmatpush1.msra.mxu0 0.0
    %643 = vmatprep.subr.mxu0 0.0
    %644 = vmatpush1.msra.mxu0 0.0
    %645 = vmatprep.subr.mxu0 0.0
    %646 = vmatpush1.msra.mxu0 0.0
    %647 = vmatprep.subr.mxu0 0.0
    %648 = vmatpush1.msra.mxu0 0.0
    %649 = vmatprep.subr.mxu0 0.0
    %650 = vmatpush1.msra.mxu0 0.0
    %651 = vmatprep.subr.mxu0 0.0
    %652 = vmatpush1.msra.mxu0 0.0
    %653 = vmatprep.subr.mxu0 0.0
    %654 = vmatpush1.msra.mxu0 0.0
    %655 = vmatprep.subr.mxu0 0.0
    %656 = vmatpush1.msra.mxu0 0.0
    %657 = vmatprep.subr.mxu0 0.0
    %658 = vmatpush1.msra.mxu0 0.0
    %659 = vmatprep.subr.mxu0 0.0
    %660 = vmatpush1.msra.mxu0 0.0
    %661 = vmatprep.subr.mxu0 0.0
    %662 = vmatpush1.msra.mxu0 0.0
    %663 = vmatprep.mubr.f32.mxu0 0.0
    %664 = vmatmul.mubr.f32.gmra.mrb[0].mxu0 %v597
    %v665 = vpop.f32.mrb[0].mxu0
    %v666 = vadd.f32 0.0, %v665
    %v667 = vpop.f32.mrb[0].mxu0
    %668 = vdwg.mxu0
    %v669 = vadd.f32 %v153, %v666
    %v670 = vxor.u32 %v669, 2147483648
    %v671 = vmul.f32 %v670, 1.442695
    %v672 = vpow.pop %v671
    %v673 = vadd.f32 %v672, 1.0
    %v674 = vrcp.pop %v673
    %v675 = vmul.f32 1.0, %v674
    %v676 = vtanh.pop %v669
    %v678 = vrot.slane %v581, 6
    %v680 = vmul.f32 %v675, %v678
    %682 = vrot.lane.b32.xlu0 %v676, 64
    %v683 = vpop.permute.xlu0 %682
    %v685 = vmul.f32 %v675, %v683
    %687 = vrot.lane.b32.xlu0 %v685, 32
    %v688 = vpop.permute.xlu0 %687
    %v690 = vadd.f32 %v680, %v688
    %v691 = vtanh.pop %v690
    %693 = vrot.lane.b32.xlu0 %v691, 64
    %v694 = vpop.permute.xlu0 %693
    %v696 = vmul.f32 %v675, %v694
    %698 = vrot.lane.b32.xlu0 %v696, 32
    %v699 = vpop.permute.xlu0 %698
    %701 = vst.msk [vmem:[#allocation2 + $0x8] sm:$0x3] %vm259, %v699
    %v702 = vsel %vm156, %v699, 0
    %704 = vmatprep.subr.mxu0 0.0
    %705 = vmatpush1.msra.mxu0 %v59
    %706 = vmatprep.subr.mxu0 0.0
    %707 = vmatpush1.msra.mxu0 %v60
    %708 = vmatprep.subr.mxu0 0.0
    %709 = vmatpush1.msra.mxu0 %v61
    %710 = vmatprep.subr.mxu0 0.0
    %711 = vmatpush1.msra.mxu0 %v62
    %712 = vmatprep.subr.mxu0 0.0
    %713 = vmatpush1.msra.mxu0 0.0
    %714 = vmatprep.subr.mxu0 0.0
    %715 = vmatpush1.msra.mxu0 0.0
    %716 = vmatprep.subr.mxu0 0.0
    %717 = vmatpush1.msra.mxu0 0.0
    %718 = vmatprep.subr.mxu0 0.0
    %719 = vmatpush1.msra.mxu0 0.0
    %720 = vmatprep.subr.mxu0 0.0
    %721 = vmatpush1.msra.mxu0 0.0
    %722 = vmatprep.subr.mxu0 0.0
    %723 = vmatpush1.msra.mxu0 0.0
    %724 = vmatprep.subr.mxu0 0.0
    %725 = vmatpush1.msra.mxu0 0.0
    %726 = vmatprep.subr.mxu0 0.0
    %727 = vmatpush1.msra.mxu0 0.0
    %728 = vmatprep.subr.mxu0 0.0
    %729 = vmatpush1.msra.mxu0 0.0
    %730 = vmatprep.subr.mxu0 0.0
    %731 = vmatpush1.msra.mxu0 0.0
    %732 = vmatprep.subr.mxu0 0.0
    %733 = vmatpush1.msra.mxu0 0.0
    %734 = vmatprep.subr.mxu0 0.0
    %735 = vmatpush1.msra.mxu0 0.0
    %736 = vmatprep.subr.mxu0 0.0
    %737 = vmatpush1.msra.mxu0 0.0
    %738 = vmatprep.subr.mxu0 0.0
    %739 = vmatpush1.msra.mxu0 0.0
    %740 = vmatprep.subr.mxu0 0.0
    %741 = vmatpush1.msra.mxu0 0.0
    %742 = vmatprep.subr.mxu0 0.0
    %743 = vmatpush1.msra.mxu0 0.0
    %744 = vmatprep.subr.mxu0 0.0
    %745 = vmatpush1.msra.mxu0 0.0
    %746 = vmatprep.subr.mxu0 0.0
    %747 = vmatpush1.msra.mxu0 0.0
    %748 = vmatprep.subr.mxu0 0.0
    %749 = vmatpush1.msra.mxu0 0.0
    %750 = vmatprep.subr.mxu0 0.0
    %751 = vmatpush1.msra.mxu0 0.0
    %752 = vmatprep.subr.mxu0 0.0
    %753 = vmatpush1.msra.mxu0 0.0
    %754 = vmatprep.subr.mxu0 0.0
    %755 = vmatpush1.msra.mxu0 0.0
    %756 = vmatprep.subr.mxu0 0.0
    %757 = vmatpush1.msra.mxu0 0.0
    %758 = vmatprep.subr.mxu0 0.0
    %759 = vmatpush1.msra.mxu0 0.0
    %760 = vmatprep.subr.mxu0 0.0
    %761 = vmatpush1.msra.mxu0 0.0
    %762 = vmatprep.subr.mxu0 0.0
    %763 = vmatpush1.msra.mxu0 0.0
    %764 = vmatprep.subr.mxu0 0.0
    %765 = vmatpush1.msra.mxu0 0.0
    %766 = vmatprep.subr.mxu0 0.0
    %767 = vmatpush1.msra.mxu0 0.0
    %768 = vmatprep.mubr.f32.mxu0 0.0
    %769 = vmatmul.mubr.f32.gmra.mrb[0].mxu0 %v702
    %v770 = vpop.f32.mrb[0].mxu0
    %v771 = vadd.f32 0.0, %v770
    %v772 = vpop.f32.mrb[0].mxu0
    %773 = vdwg.mxu0
    %v775 = vrot.slane %v771, 6
    %v777 = vadd.f32 %v153, %v775
    %v778 = vxor.u32 %v777, 2147483648
    %v779 = vmul.f32 %v778, 1.442695
    %v780 = vpow.pop %v779
    %v781 = vadd.f32 %v780, 1.0
    %v782 = vrcp.pop %v781
    %v783 = vmul.f32 1.0, %v782
    %v784 = vtanh.pop %v777
    %v786 = vrot.slane %v690, 6
    %v788 = vmul.f32 %v783, %v786
    %790 = vrot.lane.b32.xlu0 %v784, 64
    %v791 = vpop.permute.xlu0 %790
    %v793 = vmul.f32 %v783, %v791
    %795 = vrot.lane.b32.xlu0 %v793, 32
    %v796 = vpop.permute.xlu0 %795
    %v798 = vadd.f32 %v788, %v796
    %v799 = vtanh.pop %v798
    %801 = vrot.lane.b32.xlu0 %v799, 64
    %v802 = vpop.permute.xlu0 %801
    %v804 = vmul.f32 %v783, %v802
    %806 = vrot.lane.b32.xlu0 %v804, 32
    %v807 = vpop.permute.xlu0 %806
    %809 = vst.msk [vmem:[#allocation2 + $0x8] sm:$0xc] %vm368, %v807
    %v810 = vrot.slane %v804, 2
    %811 = vrot.lane.b32.xlu0 %v810, 32
    %v812 = vpop.permute.xlu0 %811
    %v813 = vsel %vm156, %v812, 0
    %815 = vmatprep.subr.mxu0 0.0
    %816 = vmatpush1.msra.mxu0 %v59
    %817 = vmatprep.subr.mxu0 0.0
    %818 = vmatpush1.msra.mxu0 %v60
    %819 = vmatprep.subr.mxu0 0.0
    %820 = vmatpush1.msra.mxu0 %v61
    %821 = vmatprep.subr.mxu0 0.0
    %822 = vmatpush1.msra.mxu0 %v62
    %823 = vmatprep.subr.mxu0 0.0
    %824 = vmatpush1.msra.mxu0 0.0
    %825 = vmatprep.subr.mxu0 0.0
    %826 = vmatpush1.msra.mxu0 0.0
    %827 = vmatprep.subr.mxu0 0.0
    %828 = vmatpush1.msra.mxu0 0.0
    %829 = vmatprep.subr.mxu0 0.0
    %830 = vmatpush1.msra.mxu0 0.0
    %831 = vmatprep.subr.mxu0 0.0
    %832 = vmatpush1.msra.mxu0 0.0
    %833 = vmatprep.subr.mxu0 0.0
    %834 = vmatpush1.msra.mxu0 0.0
    %835 = vmatprep.subr.mxu0 0.0
    %836 = vmatpush1.msra.mxu0 0.0
    %837 = vmatprep.subr.mxu0 0.0
    %838 = vmatpush1.msra.mxu0 0.0
    %839 = vmatprep.subr.mxu0 0.0
    %840 = vmatpush1.msra.mxu0 0.0
    %841 = vmatprep.subr.mxu0 0.0
    %842 = vmatpush1.msra.mxu0 0.0
    %843 = vmatprep.subr.mxu0 0.0
    %844 = vmatpush1.msra.mxu0 0.0
    %845 = vmatprep.subr.mxu0 0.0
    %846 = vmatpush1.msra.mxu0 0.0
    %847 = vmatprep.subr.mxu0 0.0
    %848 = vmatpush1.msra.mxu0 0.0
    %849 = vmatprep.subr.mxu0 0.0
    %850 = vmatpush1.msra.mxu0 0.0
    %851 = vmatprep.subr.mxu0 0.0
    %852 = vmatpush1.msra.mxu0 0.0
    %853 = vmatprep.subr.mxu0 0.0
    %854 = vmatpush1.msra.mxu0 0.0
    %855 = vmatprep.subr.mxu0 0.0
    %856 = vmatpush1.msra.mxu0 0.0
    %857 = vmatprep.subr.mxu0 0.0
    %858 = vmatpush1.msra.mxu0 0.0
    %859 = vmatprep.subr.mxu0 0.0
    %860 = vmatpush1.msra.mxu0 0.0
    %861 = vmatprep.subr.mxu0 0.0
    %862 = vmatpush1.msra.mxu0 0.0
    %863 = vmatprep.subr.mxu0 0.0
    %864 = vmatpush1.msra.mxu0 0.0
    %865 = vmatprep.subr.mxu0 0.0
    %866 = vmatpush1.msra.mxu0 0.0
    %867 = vmatprep.subr.mxu0 0.0
    %868 = vmatpush1.msra.mxu0 0.0
    %869 = vmatprep.subr.mxu0 0.0
    %870 = vmatpush1.msra.mxu0 0.0
    %871 = vmatprep.subr.mxu0 0.0
    %872 = vmatpush1.msra.mxu0 0.0
    %873 = vmatprep.subr.mxu0 0.0
    %874 = vmatpush1.msra.mxu0 0.0
    %875 = vmatprep.subr.mxu0 0.0
    %876 = vmatpush1.msra.mxu0 0.0
    %877 = vmatprep.subr.mxu0 0.0
    %878 = vmatpush1.msra.mxu0 0.0
    %879 = vmatprep.mubr.f32.mxu0 0.0
    %880 = vmatmul.mubr.f32.gmra.mrb[0].mxu0 %v813
    %v881 = vpop.f32.mrb[0].mxu0
    %v882 = vadd.f32 0.0, %v881
    %v883 = vpop.f32.mrb[0].mxu0
    %884 = vdwg.mxu0
    %v886 = vrot.slane %v882, 4
    %v888 = vadd.f32 %v153, %v886
    %v889 = vxor.u32 %v888, 2147483648
    %v890 = vmul.f32 %v889, 1.442695
    %v891 = vpow.pop %v890
    %v892 = vadd.f32 %v891, 1.0
    %v893 = vrcp.pop %v892
    %v894 = vmul.f32 1.0, %v893
    %v895 = vtanh.pop %v888
    %v897 = vrot.slane %v798, 6
    %v899 = vmul.f32 %v894, %v897
    %901 = vrot.lane.b32.xlu0 %v895, 64
    %v902 = vpop.permute.xlu0 %901
    %v904 = vmul.f32 %v894, %v902
    %906 = vrot.lane.b32.xlu0 %v904, 32
    %v907 = vpop.permute.xlu0 %906
    %v909 = vadd.f32 %v899, %v907
    %v910 = vtanh.pop %v909
    %912 = vrot.lane.b32.xlu0 %v910, 64
    %v913 = vpop.permute.xlu0 %912
    %v915 = vmul.f32 %v894, %v913
    %917 = vrot.lane.b32.xlu0 %v915, 32
    %v918 = vpop.permute.xlu0 %917
    %920 = vst.msk [vmem:[#allocation2 + $0x8] sm:$0x30] %vm480, %v918
    %v921 = vrot.slane %v915, 4
    %922 = vrot.lane.b32.xlu0 %v921, 32
    %v923 = vpop.permute.xlu0 %922
    %v924 = vsel %vm156, %v923, 0
    %926 = vmatprep.subr.mxu0 0.0
    %927 = vmatpush1.msra.mxu0 %v59
    %928 = vmatprep.subr.mxu0 0.0
    %929 = vmatpush1.msra.mxu0 %v60
    %930 = vmatprep.subr.mxu0 0.0
    %931 = vmatpush1.msra.mxu0 %v61
    %932 = vmatprep.subr.mxu0 0.0
    %933 = vmatpush1.msra.mxu0 %v62
    %934 = vmatprep.subr.mxu0 0.0
    %935 = vmatpush1.msra.mxu0 0.0
    %936 = vmatprep.subr.mxu0 0.0
    %937 = vmatpush1.msra.mxu0 0.0
    %938 = vmatprep.subr.mxu0 0.0
    %939 = vmatpush1.msra.mxu0 0.0
    %940 = vmatprep.subr.mxu0 0.0
    %941 = vmatpush1.msra.mxu0 0.0
    %942 = vmatprep.subr.mxu0 0.0
    %943 = vmatpush1.msra.mxu0 0.0
    %944 = vmatprep.subr.mxu0 0.0
    %945 = vmatpush1.msra.mxu0 0.0
    %946 = vmatprep.subr.mxu0 0.0
    %947 = vmatpush1.msra.mxu0 0.0
    %948 = vmatprep.subr.mxu0 0.0
    %949 = vmatpush1.msra.mxu0 0.0
    %950 = vmatprep.subr.mxu0 0.0
    %951 = vmatpush1.msra.mxu0 0.0
    %952 = vmatprep.subr.mxu0 0.0
    %953 = vmatpush1.msra.mxu0 0.0
    %954 = vmatprep.subr.mxu0 0.0
    %955 = vmatpush1.msra.mxu0 0.0
    %956 = vmatprep.subr.mxu0 0.0
    %957 = vmatpush1.msra.mxu0 0.0
    %958 = vmatprep.subr.mxu0 0.0
    %959 = vmatpush1.msra.mxu0 0.0
    %960 = vmatprep.subr.mxu0 0.0
    %961 = vmatpush1.msra.mxu0 0.0
    %962 = vmatprep.subr.mxu0 0.0
    %963 = vmatpush1.msra.mxu0 0.0
    %964 = vmatprep.subr.mxu0 0.0
    %965 = vmatpush1.msra.mxu0 0.0
    %966 = vmatprep.subr.mxu0 0.0
    %967 = vmatpush1.msra.mxu0 0.0
    %968 = vmatprep.subr.mxu0 0.0
    %969 = vmatpush1.msra.mxu0 0.0
    %970 = vmatprep.subr.mxu0 0.0
    %971 = vmatpush1.msra.mxu0 0.0
    %972 = vmatprep.subr.mxu0 0.0
    %973 = vmatpush1.msra.mxu0 0.0
    %974 = vmatprep.subr.mxu0 0.0
    %975 = vmatpush1.msra.mxu0 0.0
    %976 = vmatprep.subr.mxu0 0.0
    %977 = vmatpush1.msra.mxu0 0.0
    %978 = vmatprep.subr.mxu0 0.0
    %979 = vmatpush1.msra.mxu0 0.0
    %980 = vmatprep.subr.mxu0 0.0
    %981 = vmatpush1.msra.mxu0 0.0
    %982 = vmatprep.subr.mxu0 0.0
    %983 = vmatpush1.msra.mxu0 0.0
    %984 = vmatprep.subr.mxu0 0.0
    %985 = vmatpush1.msra.mxu0 0.0
    %986 = vmatprep.subr.mxu0 0.0
    %987 = vmatpush1.msra.mxu0 0.0
    %988 = vmatprep.subr.mxu0 0.0
    %989 = vmatpush1.msra.mxu0 0.0
    %990 = vmatprep.mubr.f32.mxu0 0.0
    %991 = vmatmul.mubr.f32.gmra.mrb[0].mxu0 %v924
    %v992 = vpop.f32.mrb[0].mxu0
    %v993 = vadd.f32 0.0, %v992
    %v994 = vpop.f32.mrb[0].mxu0
    %995 = vdwg.mxu0
    %v997 = vrot.slane %v993, 2
    %v999 = vadd.f32 %v153, %v997
    %v1000 = vxor.u32 %v999, 2147483648
    %v1001 = vmul.f32 %v1000, 1.442695
    %v1002 = vpow.pop %v1001
    %v1003 = vadd.f32 %v1002, 1.0
    %v1004 = vrcp.pop %v1003
    %v1005 = vmul.f32 1.0, %v1004
    %v1006 = vtanh.pop %v999
    %v1008 = vrot.slane %v909, 6
    %v1010 = vmul.f32 %v1005, %v1008
    %1012 = vrot.lane.b32.xlu0 %v1006, 64
    %v1013 = vpop.permute.xlu0 %1012
    %v1015 = vmul.f32 %v1005, %v1013
    %1017 = vrot.lane.b32.xlu0 %v1015, 32
    %v1018 = vpop.permute.xlu0 %1017
    %v1020 = vadd.f32 %v1010, %v1018
    %v1021 = vtanh.pop %v1020
    %1023 = vrot.lane.b32.xlu0 %v1021, 64
    %v1024 = vpop.permute.xlu0 %1023
    %v1026 = vmul.f32 %v1005, %v1024
    %1028 = vrot.lane.b32.xlu0 %v1026, 32
    %v1029 = vpop.permute.xlu0 %1028
    %1031 = vst.msk [vmem:[#allocation2 + $0x8] sm:$0xc0] %vm592, %v1029
    %v1032 = vld [vmem:[#allocation2] sm:$0xff]
    %v1033 = vld [vmem:[#allocation2 + $0x8] sm:$0xff]
    %v1034 = vld [vmem:[%s4] sm:$0xff]
    %v1035 = vld [vmem:[%s4 + $0x8] sm:$0xff]
    %v1036 = vld [vmem:[%s4 + $0x10] sm:$0xff]
    %v1037 = vld [vmem:[%s4 + $0x18] sm:$0xff]
    %v1038 = vld [vmem:[%s5] sm:$0xff]
    %v1039 = vld [vmem:[%s5 + $0x8] sm:$0xff]
    %v1040 = vld [vmem:[%s5 + $0x10] sm:$0xff]
    %v1041 = vld [vmem:[%s5 + $0x18] sm:$0xff]
    %v1042 = vld [vmem:[%s6] sm:$0x1]
    %v1044 = vlaneseq
    %v1045 = vshrl.u32 %v1044, 7
    %v1046 = vsub.s32 0, %v1045
    %v1047 = vrot.slane %v1042, %v1046
    %v1050 = vsel %vm156, %v1032, 0
    %v1053 = vsel %vm156, %v1033, 0
    %1055 = vmatprep.subr.mxu0 0.0
    %1056 = vmatpush1.msra.mxu0 %v1034
    %1057 = vmatprep.subr.mxu0 0.0
    %1058 = vmatpush1.msra.mxu0 %v1035
    %1059 = vmatprep.subr.mxu0 0.0
    %1060 = vmatpush1.msra.mxu0 %v1036
    %1061 = vmatprep.subr.mxu0 0.0
    %1062 = vmatpush1.msra.mxu0 %v1037
    %1063 = vmatprep.subr.mxu0 0.0
    %1064 = vmatpush1.msra.mxu0 0.0
    %1065 = vmatprep.subr.mxu0 0.0
    %1066 = vmatpush1.msra.mxu0 0.0
    %1067 = vmatprep.subr.mxu0 0.0
    %1068 = vmatpush1.msra.mxu0 0.0
    %1069 = vmatprep.subr.mxu0 0.0
    %1070 = vmatpush1.msra.mxu0 0.0
    %1071 = vmatprep.subr.mxu0 0.0
    %1072 = vmatpush1.msra.mxu0 0.0
    %1073 = vmatprep.subr.mxu0 0.0
    %1074 = vmatpush1.msra.mxu0 0.0
    %1075 = vmatprep.subr.mxu0 0.0
    %1076 = vmatpush1.msra.mxu0 0.0
    %1077 = vmatprep.subr.mxu0 0.0
    %1078 = vmatpush1.msra.mxu0 0.0
    %1079 = vmatprep.subr.mxu0 0.0
    %1080 = vmatpush1.msra.mxu0 0.0
    %1081 = vmatprep.subr.mxu0 0.0
    %1082 = vmatpush1.msra.mxu0 0.0
    %1083 = vmatprep.subr.mxu0 0.0
    %1084 = vmatpush1.msra.mxu0 0.0
    %1085 = vmatprep.subr.mxu0 0.0
    %1086 = vmatpush1.msra.mxu0 0.0
    %1087 = vmatprep.subr.mxu0 0.0
    %1088 = vmatpush1.msra.mxu0 0.0
    %1089 = vmatprep.subr.mxu0 0.0
    %1090 = vmatpush1.msra.mxu0 0.0
    %1091 = vmatprep.subr.mxu0 0.0
    %1092 = vmatpush1.msra.mxu0 0.0
    %1093 = vmatprep.subr.mxu0 0.0
    %1094 = vmatpush1.msra.mxu0 0.0
    %1095 = vmatprep.subr.mxu0 0.0
    %1096 = vmatpush1.msra.mxu0 0.0
    %1097 = vmatprep.subr.mxu0 0.0
    %1098 = vmatpush1.msra.mxu0 0.0
    %1099 = vmatprep.subr.mxu0 0.0
    %1100 = vmatpush1.msra.mxu0 0.0
    %1101 = vmatprep.subr.mxu0 0.0
    %1102 = vmatpush1.msra.mxu0 0.0
    %1103 = vmatprep.subr.mxu0 0.0
    %1104 = vmatpush1.msra.mxu0 0.0
    %1105 = vmatprep.subr.mxu0 0.0
    %1106 = vmatpush1.msra.mxu0 0.0
    %1107 = vmatprep.subr.mxu0 0.0
    %1108 = vmatpush1.msra.mxu0 0.0
    %1109 = vmatprep.subr.mxu0 0.0
    %1110 = vmatpush1.msra.mxu0 0.0
    %1111 = vmatprep.subr.mxu0 0.0
    %1112 = vmatpush1.msra.mxu0 0.0
    %1113 = vmatprep.subr.mxu0 0.0
    %1114 = vmatpush1.msra.mxu0 0.0
    %1115 = vmatprep.subr.mxu0 0.0
    %1116 = vmatpush1.msra.mxu0 0.0
    %1117 = vmatprep.subr.mxu0 0.0
    %1118 = vmatpush1.msra.mxu0 0.0
    %1119 = vmatprep.mubr.f32.mxu0 0.0
    %1120 = vmatmul.mubr.f32.gmra.mrb[0].mxu0 %v1050
    %v1121 = vpop.f32.mrb[0].mxu0
    %v1122 = vadd.f32 %v1047, %v1121
    %v1123 = vpop.f32.mrb[0].mxu0
    %1124 = vmatprep.mubr.f32.mxu0 0.0
    %1125 = vmatmul.mubr.f32.gmra.mrb[0].mxu0 %v1053
    %v1126 = vpop.f32.mrb[0].mxu0
    %v1127 = vadd.f32 %v1047, %v1126
    %v1128 = vpop.f32.mrb[0].mxu0
    %1129 = vdwg.mxu0
    %1130 = vmatprep.subr.mxu0 0.0
    %1131 = vmatpush1.msra.mxu0 %v1038
    %1132 = vmatprep.subr.mxu0 0.0
    %1133 = vmatpush1.msra.mxu0 %v1039
    %1134 = vmatprep.subr.mxu0 0.0
    %1135 = vmatpush1.msra.mxu0 %v1040
    %1136 = vmatprep.subr.mxu0 0.0
    %1137 = vmatpush1.msra.mxu0 %v1041
    %1138 = vmatprep.subr.mxu0 0.0
    %1139 = vmatpush1.msra.mxu0 0.0
    %1140 = vmatprep.subr.mxu0 0.0
    %1141 = vmatpush1.msra.mxu0 0.0
    %1142 = vmatprep.subr.mxu0 0.0
    %1143 = vmatpush1.msra.mxu0 0.0
    %1144 = vmatprep.subr.mxu0 0.0
    %1145 = vmatpush1.msra.mxu0 0.0
    %1146 = vmatprep.subr.mxu0 0.0
    %1147 = vmatpush1.msra.mxu0 0.0
    %1148 = vmatprep.subr.mxu0 0.0
    %1149 = vmatpush1.msra.mxu0 0.0
    %1150 = vmatprep.subr.mxu0 0.0
    %1151 = vmatpush1.msra.mxu0 0.0
    %1152 = vmatprep.subr.mxu0 0.0
    %1153 = vmatpush1.msra.mxu0 0.0
    %1154 = vmatprep.subr.mxu0 0.0
    %1155 = vmatpush1.msra.mxu0 0.0
    %1156 = vmatprep.subr.mxu0 0.0
    %1157 = vmatpush1.msra.mxu0 0.0
    %1158 = vmatprep.subr.mxu0 0.0
    %1159 = vmatpush1.msra.mxu0 0.0
    %1160 = vmatprep.subr.mxu0 0.0
    %1161 = vmatpush1.msra.mxu0 0.0
    %1162 = vmatprep.subr.mxu0 0.0
    %1163 = vmatpush1.msra.mxu0 0.0
    %1164 = vmatprep.subr.mxu0 0.0
    %1165 = vmatpush1.msra.mxu0 0.0
    %1166 = vmatprep.subr.mxu0 0.0
    %1167 = vmatpush1.msra.mxu0 0.0
    %1168 = vmatprep.subr.mxu0 0.0
    %1169 = vmatpush1.msra.mxu0 0.0
    %1170 = vmatprep.subr.mxu0 0.0
    %1171 = vmatpush1.msra.mxu0 0.0
    %1172 = vmatprep.subr.mxu0 0.0
    %1173 = vmatpush1.msra.mxu0 0.0
    %1174 = vmatprep.subr.mxu0 0.0
    %1175 = vmatpush1.msra.mxu0 0.0
    %1176 = vmatprep.subr.mxu0 0.0
    %1177 = vmatpush1.msra.mxu0 0.0
    %1178 = vmatprep.subr.mxu0 0.0
    %1179 = vmatpush1.msra.mxu0 0.0
    %1180 = vmatprep.subr.mxu0 0.0
    %1181 = vmatpush1.msra.mxu0 0.0
    %1182 = vmatprep.subr.mxu0 0.0
    %1183 = vmatpush1.msra.mxu0 0.0
    %1184 = vmatprep.subr.mxu0 0.0
    %1185 = vmatpush1.msra.mxu0 0.0
    %1186 = vmatprep.subr.mxu0 0.0
    %1187 = vmatpush1.msra.mxu0 0.0
    %1188 = vmatprep.subr.mxu0 0.0
    %1189 = vmatpush1.msra.mxu0 0.0
    %1190 = vmatprep.subr.mxu0 0.0
    %1191 = vmatpush1.msra.mxu0 0.0
    %1192 = vmatprep.subr.mxu0 0.0
    %1193 = vmatpush1.msra.mxu0 0.0
    %1194 = vmatprep.mubr.f32.mxu0 0.0
    %1195 = vmatmul.mubr.f32.gmra.mrb[0].mxu0 %v158
    %v1196 = vpop.f32.mrb[0].mxu0
    %v1197 = vadd.f32 0.0, %v1196
    %v1198 = vpop.f32.mrb[0].mxu0
    %1199 = vdwg.mxu0
    %v1200 = vadd.f32 %v1122, %v1197
    %v1201 = vxor.u32 %v1200, 2147483648
    %v1202 = vmul.f32 %v1201, 1.442695
    %v1203 = vpow.pop %v1202
    %v1204 = vadd.f32 %v1203, 1.0
    %v1205 = vrcp.pop %v1204
    %v1206 = vmul.f32 1.0, %v1205
    %v1207 = vtanh.pop %v1200
    %v1208 = vmul.f32 %v1206, 0.0
    %1210 = vrot.lane.b32.xlu0 %v1207, 64
    %v1211 = vpop.permute.xlu0 %1210
    %v1213 = vmul.f32 %v1206, %v1211
    %1215 = vrot.lane.b32.xlu0 %v1213, 32
    %v1216 = vpop.permute.xlu0 %1215
    %v1218 = vadd.f32 %v1208, %v1216
    %v1219 = vtanh.pop %v1218
    %1221 = vrot.lane.b32.xlu0 %v1219, 64
    %v1222 = vpop.permute.xlu0 %1221
    %v1224 = vmul.f32 %v1206, %v1222
    %1226 = vrot.lane.b32.xlu0 %v1224, 32
    %v1227 = vpop.permute.xlu0 %1226
    %1229 = vst.msk [vmem:[#allocation2] sm:$0x3] %vm259, %v1227
    %v1230 = vsel %vm156, %v1227, 0
    %1232 = vmatprep.subr.mxu0 0.0
    %1233 = vmatpush1.msra.mxu0 %v1038
    %1234 = vmatprep.subr.mxu0 0.0
    %1235 = vmatpush1.msra.mxu0 %v1039
    %1236 = vmatprep.subr.mxu0 0.0
    %1237 = vmatpush1.msra.mxu0 %v1040
    %1238 = vmatprep.subr.mxu0 0.0
    %1239 = vmatpush1.msra.mxu0 %v1041
    %1240 = vmatprep.subr.mxu0 0.0
    %1241 = vmatpush1.msra.mxu0 0.0
    %1242 = vmatprep.subr.mxu0 0.0
    %1243 = vmatpush1.msra.mxu0 0.0
    %1244 = vmatprep.subr.mxu0 0.0
    %1245 = vmatpush1.msra.mxu0 0.0
    %1246 = vmatprep.subr.mxu0 0.0
    %1247 = vmatpush1.msra.mxu0 0.0
    %1248 = vmatprep.subr.mxu0 0.0
    %1249 = vmatpush1.msra.mxu0 0.0
    %1250 = vmatprep.subr.mxu0 0.0
    %1251 = vmatpush1.msra.mxu0 0.0
    %1252 = vmatprep.subr.mxu0 0.0
    %1253 = vmatpush1.msra.mxu0 0.0
    %1254 = vmatprep.subr.mxu0 0.0
    %1255 = vmatpush1.msra.mxu0 0.0
    %1256 = vmatprep.subr.mxu0 0.0
    %1257 = vmatpush1.msra.mxu0 0.0
    %1258 = vmatprep.subr.mxu0 0.0
    %1259 = vmatpush1.msra.mxu0 0.0
    %1260 = vmatprep.subr.mxu0 0.0
    %1261 = vmatpush1.msra.mxu0 0.0
    %1262 = vmatprep.subr.mxu0 0.0
    %1263 = vmatpush1.msra.mxu0 0.0
    %1264 = vmatprep.subr.mxu0 0.0
    %1265 = vmatpush1.msra.mxu0 0.0
    %1266 = vmatprep.subr.mxu0 0.0
    %1267 = vmatpush1.msra.mxu0 0.0
    %1268 = vmatprep.subr.mxu0 0.0
    %1269 = vmatpush1.msra.mxu0 0.0
    %1270 = vmatprep.subr.mxu0 0.0
    %1271 = vmatpush1.msra.mxu0 0.0
    %1272 = vmatprep.subr.mxu0 0.0
    %1273 = vmatpush1.msra.mxu0 0.0
    %1274 = vmatprep.subr.mxu0 0.0
    %1275 = vmatpush1.msra.mxu0 0.0
    %1276 = vmatprep.subr.mxu0 0.0
    %1277 = vmatpush1.msra.mxu0 0.0
    %1278 = vmatprep.subr.mxu0 0.0
    %1279 = vmatpush1.msra.mxu0 0.0
    %1280 = vmatprep.subr.mxu0 0.0
    %1281 = vmatpush1.msra.mxu0 0.0
    %1282 = vmatprep.subr.mxu0 0.0
    %1283 = vmatpush1.msra.mxu0 0.0
    %1284 = vmatprep.subr.mxu0 0.0
    %1285 = vmatpush1.msra.mxu0 0.0
    %1286 = vmatprep.subr.mxu0 0.0
    %1287 = vmatpush1.msra.mxu0 0.0
    %1288 = vmatprep.subr.mxu0 0.0
    %1289 = vmatpush1.msra.mxu0 0.0
    %1290 = vmatprep.subr.mxu0 0.0
    %1291 = vmatpush1.msra.mxu0 0.0
    %1292 = vmatprep.subr.mxu0 0.0
    %1293 = vmatpush1.msra.mxu0 0.0
    %1294 = vmatprep.subr.mxu0 0.0
    %1295 = vmatpush1.msra.mxu0 0.0
    %1296 = vmatprep.mubr.f32.mxu0 0.0
    %1297 = vmatmul.mubr.f32.gmra.mrb[0].mxu0 %v1230
    %v1298 = vpop.f32.mrb[0].mxu0
    %v1299 = vadd.f32 0.0, %v1298
    %v1300 = vpop.f32.mrb[0].mxu0
    %1301 = vdwg.mxu0
    %v1303 = vrot.slane %v1299, 6
    %v1305 = vadd.f32 %v1122, %v1303
    %v1306 = vxor.u32 %v1305, 2147483648
    %v1307 = vmul.f32 %v1306, 1.442695
    %v1308 = vpow.pop %v1307
    %v1309 = vadd.f32 %v1308, 1.0
    %v1310 = vrcp.pop %v1309
    %v1311 = vmul.f32 1.0, %v1310
    %v1312 = vtanh.pop %v1305
    %v1314 = vrot.slane %v1218, 6
    %v1316 = vmul.f32 %v1311, %v1314
    %1318 = vrot.lane.b32.xlu0 %v1312, 64
    %v1319 = vpop.permute.xlu0 %1318
    %v1321 = vmul.f32 %v1311, %v1319
    %1323 = vrot.lane.b32.xlu0 %v1321, 32
    %v1324 = vpop.permute.xlu0 %1323
    %v1326 = vadd.f32 %v1316, %v1324
    %v1327 = vtanh.pop %v1326
    %1329 = vrot.lane.b32.xlu0 %v1327, 64
    %v1330 = vpop.permute.xlu0 %1329
    %v1332 = vmul.f32 %v1311, %v1330
    %1334 = vrot.lane.b32.xlu0 %v1332, 32
    %v1335 = vpop.permute.xlu0 %1334
    %1337 = vst.msk [vmem:[#allocation2] sm:$0xc] %vm368, %v1335
    %v1338 = vrot.slane %v1332, 2
    %1339 = vrot.lane.b32.xlu0 %v1338, 32
    %v1340 = vpop.permute.xlu0 %1339
    %v1341 = vsel %vm156, %v1340, 0
    %1343 = vmatprep.subr.mxu0 0.0
    %1344 = vmatpush1.msra.mxu0 %v1038
    %1345 = vmatprep.subr.mxu0 0.0
    %1346 = vmatpush1.msra.mxu0 %v1039
    %1347 = vmatprep.subr.mxu0 0.0
    %1348 = vmatpush1.msra.mxu0 %v1040
    %1349 = vmatprep.subr.mxu0 0.0
    %1350 = vmatpush1.msra.mxu0 %v1041
    %1351 = vmatprep.subr.mxu0 0.0
    %1352 = vmatpush1.msra.mxu0 0.0
    %1353 = vmatprep.subr.mxu0 0.0
    %1354 = vmatpush1.msra.mxu0 0.0
    %1355 = vmatprep.subr.mxu0 0.0
    %1356 = vmatpush1.msra.mxu0 0.0
    %1357 = vmatprep.subr.mxu0 0.0
    %1358 = vmatpush1.msra.mxu0 0.0
    %1359 = vmatprep.subr.mxu0 0.0
    %1360 = vmatpush1.msra.mxu0 0.0
    %1361 = vmatprep.subr.mxu0 0.0
    %1362 = vmatpush1.msra.mxu0 0.0
    %1363 = vmatprep.subr.mxu0 0.0
    %1364 = vmatpush1.msra.mxu0 0.0
    %1365 = vmatprep.subr.mxu0 0.0
    %1366 = vmatpush1.msra.mxu0 0.0
    %1367 = vmatprep.subr.mxu0 0.0
    %1368 = vmatpush1.msra.mxu0 0.0
    %1369 = vmatprep.subr.mxu0 0.0
    %1370 = vmatpush1.msra.mxu0 0.0
    %1371 = vmatprep.subr.mxu0 0.0
    %1372 = vmatpush1.msra.mxu0 0.0
    %1373 = vmatprep.subr.mxu0 0.0
    %1374 = vmatpush1.msra.mxu0 0.0
    %1375 = vmatprep.subr.mxu0 0.0
    %1376 = vmatpush1.msra.mxu0 0.0
    %1377 = vmatprep.subr.mxu0 0.0
    %1378 = vmatpush1.msra.mxu0 0.0
    %1379 = vmatprep.subr.mxu0 0.0
    %1380 = vmatpush1.msra.mxu0 0.0
    %1381 = vmatprep.subr.mxu0 0.0
    %1382 = vmatpush1.msra.mxu0 0.0
    %1383 = vmatprep.subr.mxu0 0.0
    %1384 = vmatpush1.msra.mxu0 0.0
    %1385 = vmatprep.subr.mxu0 0.0
    %1386 = vmatpush1.msra.mxu0 0.0
    %1387 = vmatprep.subr.mxu0 0.0
    %1388 = vmatpush1.msra.mxu0 0.0
    %1389 = vmatprep.subr.mxu0 0.0
    %1390 = vmatpush1.msra.mxu0 0.0
    %1391 = vmatprep.subr.mxu0 0.0
    %1392 = vmatpush1.msra.mxu0 0.0
    %1393 = vmatprep.subr.mxu0 0.0
    %1394 = vmatpush1.msra.mxu0 0.0
    %1395 = vmatprep.subr.mxu0 0.0
    %1396 = vmatpush1.msra.mxu0 0.0
    %1397 = vmatprep.subr.mxu0 0.0
    %1398 = vmatpush1.msra.mxu0 0.0
    %1399 = vmatprep.subr.mxu0 0.0
    %1400 = vmatpush1.msra.mxu0 0.0
    %1401 = vmatprep.subr.mxu0 0.0
    %1402 = vmatpush1.msra.mxu0 0.0
    %1403 = vmatprep.subr.mxu0 0.0
    %1404 = vmatpush1.msra.mxu0 0.0
    %1405 = vmatprep.subr.mxu0 0.0
    %1406 = vmatpush1.msra.mxu0 0.0
    %1407 = vmatprep.mubr.f32.mxu0 0.0
    %1408 = vmatmul.mubr.f32.gmra.mrb[0].mxu0 %v1341
    %v1409 = vpop.f32.mrb[0].mxu0
    %v1410 = vadd.f32 0.0, %v1409
    %v1411 = vpop.f32.mrb[0].mxu0
    %1412 = vdwg.mxu0
    %v1414 = vrot.slane %v1410, 4
    %v1416 = vadd.f32 %v1122, %v1414
    %v1417 = vxor.u32 %v1416, 2147483648
    %v1418 = vmul.f32 %v1417, 1.442695
    %v1419 = vpow.pop %v1418
    %v1420 = vadd.f32 %v1419, 1.0
    %v1421 = vrcp.pop %v1420
    %v1422 = vmul.f32 1.0, %v1421
    %v1423 = vtanh.pop %v1416
    %v1425 = vrot.slane %v1326, 6
    %v1427 = vmul.f32 %v1422, %v1425
    %1429 = vrot.lane.b32.xlu0 %v1423, 64
    %v1430 = vpop.permute.xlu0 %1429
    %v1432 = vmul.f32 %v1422, %v1430
    %1434 = vrot.lane.b32.xlu0 %v1432, 32
    %v1435 = vpop.permute.xlu0 %1434
    %v1437 = vadd.f32 %v1427, %v1435
    %v1438 = vtanh.pop %v1437
    %1440 = vrot.lane.b32.xlu0 %v1438, 64
    %v1441 = vpop.permute.xlu0 %1440
    %v1443 = vmul.f32 %v1422, %v1441
    %1445 = vrot.lane.b32.xlu0 %v1443, 32
    %v1446 = vpop.permute.xlu0 %1445
    %1448 = vst.msk [vmem:[#allocation2] sm:$0x30] %vm480, %v1446
    %v1449 = vrot.slane %v1443, 4
    %1450 = vrot.lane.b32.xlu0 %v1449, 32
    %v1451 = vpop.permute.xlu0 %1450
    %v1452 = vsel %vm156, %v1451, 0
    %1454 = vmatprep.subr.mxu0 0.0
    %1455 = vmatpush1.msra.mxu0 %v1038
    %1456 = vmatprep.subr.mxu0 0.0
    %1457 = vmatpush1.msra.mxu0 %v1039
    %1458 = vmatprep.subr.mxu0 0.0
    %1459 = vmatpush1.msra.mxu0 %v1040
    %1460 = vmatprep.subr.mxu0 0.0
    %1461 = vmatpush1.msra.mxu0 %v1041
    %1462 = vmatprep.subr.mxu0 0.0
    %1463 = vmatpush1.msra.mxu0 0.0
    %1464 = vmatprep.subr.mxu0 0.0
    %1465 = vmatpush1.msra.mxu0 0.0
    %1466 = vmatprep.subr.mxu0 0.0
    %1467 = vmatpush1.msra.mxu0 0.0
    %1468 = vmatprep.subr.mxu0 0.0
    %1469 = vmatpush1.msra.mxu0 0.0
    %1470 = vmatprep.subr.mxu0 0.0
    %1471 = vmatpush1.msra.mxu0 0.0
    %1472 = vmatprep.subr.mxu0 0.0
    %1473 = vmatpush1.msra.mxu0 0.0
    %1474 = vmatprep.subr.mxu0 0.0
    %1475 = vmatpush1.msra.mxu0 0.0
    %1476 = vmatprep.subr.mxu0 0.0
    %1477 = vmatpush1.msra.mxu0 0.0
    %1478 = vmatprep.subr.mxu0 0.0
    %1479 = vmatpush1.msra.mxu0 0.0
    %1480 = vmatprep.subr.mxu0 0.0
    %1481 = vmatpush1.msra.mxu0 0.0
    %1482 = vmatprep.subr.mxu0 0.0
    %1483 = vmatpush1.msra.mxu0 0.0
    %1484 = vmatprep.subr.mxu0 0.0
    %1485 = vmatpush1.msra.mxu0 0.0
    %1486 = vmatprep.subr.mxu0 0.0
    %1487 = vmatpush1.msra.mxu0 0.0
    %1488 = vmatprep.subr.mxu0 0.0
    %1489 = vmatpush1.msra.mxu0 0.0
    %1490 = vmatprep.subr.mxu0 0.0
    %1491 = vmatpush1.msra.mxu0 0.0
    %1492 = vmatprep.subr.mxu0 0.0
    %1493 = vmatpush1.msra.mxu0 0.0
    %1494 = vmatprep.subr.mxu0 0.0
    %1495 = vmatpush1.msra.mxu0 0.0
    %1496 = vmatprep.subr.mxu0 0.0
    %1497 = vmatpush1.msra.mxu0 0.0
    %1498 = vmatprep.subr.mxu0 0.0
    %1499 = vmatpush1.msra.mxu0 0.0
    %1500 = vmatprep.subr.mxu0 0.0
    %1501 = vmatpush1.msra.mxu0 0.0
    %1502 = vmatprep.subr.mxu0 0.0
    %1503 = vmatpush1.msra.mxu0 0.0
    %1504 = vmatprep.subr.mxu0 0.0
    %1505 = vmatpush1.msra.mxu0 0.0
    %1506 = vmatprep.subr.mxu0 0.0
    %1507 = vmatpush1.msra.mxu0 0.0
    %1508 = vmatprep.subr.mxu0 0.0
    %1509 = vmatpush1.msra.mxu0 0.0
    %1510 = vmatprep.subr.mxu0 0.0
    %1511 = vmatpush1.msra.mxu0 0.0
    %1512 = vmatprep.subr.mxu0 0.0
    %1513 = vmatpush1.msra.mxu0 0.0
    %1514 = vmatprep.subr.mxu0 0.0
    %1515 = vmatpush1.msra.mxu0 0.0
    %1516 = vmatprep.subr.mxu0 0.0
    %1517 = vmatpush1.msra.mxu0 0.0
    %1518 = vmatprep.mubr.f32.mxu0 0.0
    %1519 = vmatmul.mubr.f32.gmra.mrb[0].mxu0 %v1452
    %v1520 = vpop.f32.mrb[0].mxu0
    %v1521 = vadd.f32 0.0, %v1520
    %v1522 = vpop.f32.mrb[0].mxu0
    %1523 = vdwg.mxu0
    %v1525 = vrot.slane %v1521, 2
    %v1527 = vadd.f32 %v1122, %v1525
    %v1528 = vxor.u32 %v1527, 2147483648
    %v1529 = vmul.f32 %v1528, 1.442695
    %v1530 = vpow.pop %v1529
    %v1531 = vadd.f32 %v1530, 1.0
    %v1532 = vrcp.pop %v1531
    %v1533 = vmul.f32 1.0, %v1532
    %v1534 = vtanh.pop %v1527
    %v1536 = vrot.slane %v1437, 6
    %v1538 = vmul.f32 %v1533, %v1536
    %1540 = vrot.lane.b32.xlu0 %v1534, 64
    %v1541 = vpop.permute.xlu0 %1540
    %v1543 = vmul.f32 %v1533, %v1541
    %1545 = vrot.lane.b32.xlu0 %v1543, 32
    %v1546 = vpop.permute.xlu0 %1545
    %v1548 = vadd.f32 %v1538, %v1546
    %v1549 = vtanh.pop %v1548
    %1551 = vrot.lane.b32.xlu0 %v1549, 64
    %v1552 = vpop.permute.xlu0 %1551
    %v1554 = vmul.f32 %v1533, %v1552
    %1556 = vrot.lane.b32.xlu0 %v1554, 32
    %v1557 = vpop.permute.xlu0 %1556
    %1559 = vst.msk [vmem:[#allocation2] sm:$0xc0] %vm592, %v1557
    %v1560 = vrot.slane %v1554, 6
    %1561 = vrot.lane.b32.xlu0 %v1560, 32
    %v1562 = vpop.permute.xlu0 %1561
    %v1563 = vsel %vm156, %v1562, 0
    %1565 = vmatprep.subr.mxu0 0.0
    %1566 = vmatpush1.msra.mxu0 %v1038
    %1567 = vmatprep.subr.mxu0 0.0
    %1568 = vmatpush1.msra.mxu0 %v1039
    %1569 = vmatprep.subr.mxu0 0.0
    %1570 = vmatpush1.msra.mxu0 %v1040
    %1571 = vmatprep.subr.mxu0 0.0
    %1572 = vmatpush1.msra.mxu0 %v1041
    %1573 = vmatprep.subr.mxu0 0.0
    %1574 = vmatpush1.msra.mxu0 0.0
    %1575 = vmatprep.subr.mxu0 0.0
    %1576 = vmatpush1.msra.mxu0 0.0
    %1577 = vmatprep.subr.mxu0 0.0
    %1578 = vmatpush1.msra.mxu0 0.0
    %1579 = vmatprep.subr.mxu0 0.0
    %1580 = vmatpush1.msra.mxu0 0.0
    %1581 = vmatprep.subr.mxu0 0.0
    %1582 = vmatpush1.msra.mxu0 0.0
    %1583 = vmatprep.subr.mxu0 0.0
    %1584 = vmatpush1.msra.mxu0 0.0
    %1585 = vmatprep.subr.mxu0 0.0
    %1586 = vmatpush1.msra.mxu0 0.0
    %1587 = vmatprep.subr.mxu0 0.0
    %1588 = vmatpush1.msra.mxu0 0.0
    %1589 = vmatprep.subr.mxu0 0.0
    %1590 = vmatpush1.msra.mxu0 0.0
    %1591 = vmatprep.subr.mxu0 0.0
    %1592 = vmatpush1.msra.mxu0 0.0
    %1593 = vmatprep.subr.mxu0 0.0
    %1594 = vmatpush1.msra.mxu0 0.0
    %1595 = vmatprep.subr.mxu0 0.0
    %1596 = vmatpush1.msra.mxu0 0.0
    %1597 = vmatprep.subr.mxu0 0.0
    %1598 = vmatpush1.msra.mxu0 0.0
    %1599 = vmatprep.subr.mxu0 0.0
    %1600 = vmatpush1.msra.mxu0 0.0
    %1601 = vmatprep.subr.mxu0 0.0
    %1602 = vmatpush1.msra.mxu0 0.0
    %1603 = vmatprep.subr.mxu0 0.0
    %1604 = vmatpush1.msra.mxu0 0.0
    %1605 = vmatprep.subr.mxu0 0.0
    %1606 = vmatpush1.msra.mxu0 0.0
    %1607 = vmatprep.subr.mxu0 0.0
    %1608 = vmatpush1.msra.mxu0 0.0
    %1609 = vmatprep.subr.mxu0 0.0
    %1610 = vmatpush1.msra.mxu0 0.0
    %1611 = vmatprep.subr.mxu0 0.0
    %1612 = vmatpush1.msra.mxu0 0.0
    %1613 = vmatprep.subr.mxu0 0.0
    %1614 = vmatpush1.msra.mxu0 0.0
    %1615 = vmatprep.subr.mxu0 0.0
    %1616 = vmatpush1.msra.mxu0 0.0
    %1617 = vmatprep.subr.mxu0 0.0
    %1618 = vmatpush1.msra.mxu0 0.0
    %1619 = vmatprep.subr.mxu0 0.0
    %1620 = vmatpush1.msra.mxu0 0.0
    %1621 = vmatprep.subr.mxu0 0.0
    %1622 = vmatpush1.msra.mxu0 0.0
    %1623 = vmatprep.subr.mxu0 0.0
    %1624 = vmatpush1.msra.mxu0 0.0
    %1625 = vmatprep.subr.mxu0 0.0
    %1626 = vmatpush1.msra.mxu0 0.0
    %1627 = vmatprep.subr.mxu0 0.0
    %1628 = vmatpush1.msra.mxu0 0.0
    %1629 = vmatprep.mubr.f32.mxu0 0.0
    %1630 = vmatmul.mubr.f32.gmra.mrb[0].mxu0 %v1563
    %v1631 = vpop.f32.mrb[0].mxu0
    %v1632 = vadd.f32 0.0, %v1631
    %v1633 = vpop.f32.mrb[0].mxu0
    %1634 = vdwg.mxu0
    %v1635 = vadd.f32 %v1127, %v1632
    %v1636 = vxor.u32 %v1635, 2147483648
    %v1637 = vmul.f32 %v1636, 1.442695
    %v1638 = vpow.pop %v1637
    %v1639 = vadd.f32 %v1638, 1.0
    %v1640 = vrcp.pop %v1639
    %v1641 = vmul.f32 1.0, %v1640
    %v1642 = vtanh.pop %v1635
    %v1644 = vrot.slane %v1548, 6
    %v1646 = vmul.f32 %v1641, %v1644
    %1648 = vrot.lane.b32.xlu0 %v1642, 64
    %v1649 = vpop.permute.xlu0 %1648
    %v1651 = vmul.f32 %v1641, %v1649
    %1653 = vrot.lane.b32.xlu0 %v1651, 32
    %v1654 = vpop.permute.xlu0 %1653
    %v1656 = vadd.f32 %v1646, %v1654
    %v1657 = vtanh.pop %v1656
    %1659 = vrot.lane.b32.xlu0 %v1657, 64
    %v1660 = vpop.permute.xlu0 %1659
    %v1662 = vmul.f32 %v1641, %v1660
    %1664 = vrot.lane.b32.xlu0 %v1662, 32
    %v1665 = vpop.permute.xlu0 %1664
    %1667 = vst.msk [vmem:[#allocation2 + $0x8] sm:$0x3] %vm259, %v1665
    %v1668 = vsel %vm156, %v1665, 0
    %1670 = vmatprep.subr.mxu0 0.0
    %1671 = vmatpush1.msra.mxu0 %v1038
    %1672 = vmatprep.subr.mxu0 0.0
    %1673 = vmatpush1.msra.mxu0 %v1039
    %1674 = vmatprep.subr.mxu0 0.0
    %1675 = vmatpush1.msra.mxu0 %v1040
    %1676 = vmatprep.subr.mxu0 0.0
    %1677 = vmatpush1.msra.mxu0 %v1041
    %1678 = vmatprep.subr.mxu0 0.0
    %1679 = vmatpush1.msra.mxu0 0.0
    %1680 = vmatprep.subr.mxu0 0.0
    %1681 = vmatpush1.msra.mxu0 0.0
    %1682 = vmatprep.subr.mxu0 0.0
    %1683 = vmatpush1.msra.mxu0 0.0
    %1684 = vmatprep.subr.mxu0 0.0
    %1685 = vmatpush1.msra.mxu0 0.0
    %1686 = vmatprep.subr.mxu0 0.0
    %1687 = vmatpush1.msra.mxu0 0.0
    %1688 = vmatprep.subr.mxu0 0.0
    %1689 = vmatpush1.msra.mxu0 0.0
    %1690 = vmatprep.subr.mxu0 0.0
    %1691 = vmatpush1.msra.mxu0 0.0
    %1692 = vmatprep.subr.mxu0 0.0
    %1693 = vmatpush1.msra.mxu0 0.0
    %1694 = vmatprep.subr.mxu0 0.0
    %1695 = vmatpush1.msra.mxu0 0.0
    %1696 = vmatprep.subr.mxu0 0.0
    %1697 = vmatpush1.msra.mxu0 0.0
    %1698 = vmatprep.subr.mxu0 0.0
    %1699 = vmatpush1.msra.mxu0 0.0
    %1700 = vmatprep.subr.mxu0 0.0
    %1701 = vmatpush1.msra.mxu0 0.0
    %1702 = vmatprep.subr.mxu0 0.0
    %1703 = vmatpush1.msra.mxu0 0.0
    %1704 = vmatprep.subr.mxu0 0.0
    %1705 = vmatpush1.msra.mxu0 0.0
    %1706 = vmatprep.subr.mxu0 0.0
    %1707 = vmatpush1.msra.mxu0 0.0
    %1708 = vmatprep.subr.mxu0 0.0
    %1709 = vmatpush1.msra.mxu0 0.0
    %1710 = vmatprep.subr.mxu0 0.0
    %1711 = vmatpush1.msra.mxu0 0.0
    %1712 = vmatprep.subr.mxu0 0.0
    %1713 = vmatpush1.msra.mxu0 0.0
    %1714 = vmatprep.subr.mxu0 0.0
    %1715 = vmatpush1.msra.mxu0 0.0
    %1716 = vmatprep.subr.mxu0 0.0
    %1717 = vmatpush1.msra.mxu0 0.0
    %1718 = vmatprep.subr.mxu0 0.0
    %1719 = vmatpush1.msra.mxu0 0.0
    %1720 = vmatprep.subr.mxu0 0.0
    %1721 = vmatpush1.msra.mxu0 0.0
    %1722 = vmatprep.subr.mxu0 0.0
    %1723 = vmatpush1.msra.mxu0 0.0
    %1724 = vmatprep.subr.mxu0 0.0
    %1725 = vmatpush1.msra.mxu0 0.0
    %1726 = vmatprep.subr.mxu0 0.0
    %1727 = vmatpush1.msra.mxu0 0.0
    %1728 = vmatprep.subr.mxu0 0.0
    %1729 = vmatpush1.msra.mxu0 0.0
    %1730 = vmatprep.subr.mxu0 0.0
    %1731 = vmatpush1.msra.mxu0 0.0
    %1732 = vmatprep.subr.mxu0 0.0
    %1733 = vmatpush1.msra.mxu0 0.0
    %1734 = vmatprep.mubr.f32.mxu0 0.0
    %1735 = vmatmul.mubr.f32.gmra.mrb[0].mxu0 %v1668
    %v1736 = vpop.f32.mrb[0].mxu0
    %v1737 = vadd.f32 0.0, %v1736
    %v1738 = vpop.f32.mrb[0].mxu0
    %1739 = vdwg.mxu0
    %v1741 = vrot.slane %v1737, 6
    %v1743 = vadd.f32 %v1127, %v1741
    %v1744 = vxor.u32 %v1743, 2147483648
    %v1745 = vmul.f32 %v1744, 1.442695
    %v1746 = vpow.pop %v1745
    %v1747 = vadd.f32 %v1746, 1.0
    %v1748 = vrcp.pop %v1747
    %v1749 = vmul.f32 1.0, %v1748
    %v1750 = vtanh.pop %v1743
    %v1752 = vrot.slane %v1656, 6
    %v1754 = vmul.f32 %v1749, %v1752
    %1756 = vrot.lane.b32.xlu0 %v1750, 64
    %v1757 = vpop.permute.xlu0 %1756
    %v1759 = vmul.f32 %v1749, %v1757
    %1761 = vrot.lane.b32.xlu0 %v1759, 32
    %v1762 = vpop.permute.xlu0 %1761
    %v1764 = vadd.f32 %v1754, %v1762
    %v1765 = vtanh.pop %v1764
    %1767 = vrot.lane.b32.xlu0 %v1765, 64
    %v1768 = vpop.permute.xlu0 %1767
    %v1770 = vmul.f32 %v1749, %v1768
    %1772 = vrot.lane.b32.xlu0 %v1770, 32
    %v1773 = vpop.permute.xlu0 %1772
    %1775 = vst.msk [vmem:[#allocation2 + $0x8] sm:$0xc] %vm368, %v1773
    %v1776 = vrot.slane %v1770, 2
    %1777 = vrot.lane.b32.xlu0 %v1776, 32
    %v1778 = vpop.permute.xlu0 %1777
    %v1779 = vsel %vm156, %v1778, 0
    %1781 = vmatprep.subr.mxu0 0.0
    %1782 = vmatpush1.msra.mxu0 %v1038
    %1783 = vmatprep.subr.mxu0 0.0
    %1784 = vmatpush1.msra.mxu0 %v1039
    %1785 = vmatprep.subr.mxu0 0.0
    %1786 = vmatpush1.msra.mxu0 %v1040
    %1787 = vmatprep.subr.mxu0 0.0
    %1788 = vmatpush1.msra.mxu0 %v1041
    %1789 = vmatprep.subr.mxu0 0.0
    %1790 = vmatpush1.msra.mxu0 0.0
    %1791 = vmatprep.subr.mxu0 0.0
    %1792 = vmatpush1.msra.mxu0 0.0
    %1793 = vmatprep.subr.mxu0 0.0
    %1794 = vmatpush1.msra.mxu0 0.0
    %1795 = vmatprep.subr.mxu0 0.0
    %1796 = vmatpush1.msra.mxu0 0.0
    %1797 = vmatprep.subr.mxu0 0.0
    %1798 = vmatpush1.msra.mxu0 0.0
    %1799 = vmatprep.subr.mxu0 0.0
    %1800 = vmatpush1.msra.mxu0 0.0
    %1801 = vmatprep.subr.mxu0 0.0
    %1802 = vmatpush1.msra.mxu0 0.0
    %1803 = vmatprep.subr.mxu0 0.0
    %1804 = vmatpush1.msra.mxu0 0.0
    %1805 = vmatprep.subr.mxu0 0.0
    %1806 = vmatpush1.msra.mxu0 0.0
    %1807 = vmatprep.subr.mxu0 0.0
    %1808 = vmatpush1.msra.mxu0 0.0
    %1809 = vmatprep.subr.mxu0 0.0
    %1810 = vmatpush1.msra.mxu0 0.0
    %1811 = vmatprep.subr.mxu0 0.0
    %1812 = vmatpush1.msra.mxu0 0.0
    %1813 = vmatprep.subr.mxu0 0.0
    %1814 = vmatpush1.msra.mxu0 0.0
    %1815 = vmatprep.subr.mxu0 0.0
    %1816 = vmatpush1.msra.mxu0 0.0
    %1817 = vmatprep.subr.mxu0 0.0
    %1818 = vmatpush1.msra.mxu0 0.0
    %1819 = vmatprep.subr.mxu0 0.0
    %1820 = vmatpush1.msra.mxu0 0.0
    %1821 = vmatprep.subr.mxu0 0.0
    %1822 = vmatpush1.msra.mxu0 0.0
    %1823 = vmatprep.subr.mxu0 0.0
    %1824 = vmatpush1.msra.mxu0 0.0
    %1825 = vmatprep.subr.mxu0 0.0
    %1826 = vmatpush1.msra.mxu0 0.0
    %1827 = vmatprep.subr.mxu0 0.0
    %1828 = vmatpush1.msra.mxu0 0.0
    %1829 = vmatprep.subr.mxu0 0.0
    %1830 = vmatpush1.msra.mxu0 0.0
    %1831 = vmatprep.subr.mxu0 0.0
    %1832 = vmatpush1.msra.mxu0 0.0
    %1833 = vmatprep.subr.mxu0 0.0
    %1834 = vmatpush1.msra.mxu0 0.0
    %1835 = vmatprep.subr.mxu0 0.0
    %1836 = vmatpush1.msra.mxu0 0.0
    %1837 = vmatprep.subr.mxu0 0.0
    %1838 = vmatpush1.msra.mxu0 0.0
    %1839 = vmatprep.subr.mxu0 0.0
    %1840 = vmatpush1.msra.mxu0 0.0
    %1841 = vmatprep.subr.mxu0 0.0
    %1842 = vmatpush1.msra.mxu0 0.0
    %1843 = vmatprep.subr.mxu0 0.0
    %1844 = vmatpush1.msra.mxu0 0.0
    %1845 = vmatprep.mubr.f32.mxu0 0.0
    %1846 = vmatmul.mubr.f32.gmra.mrb[0].mxu0 %v1779
    %v1847 = vpop.f32.mrb[0].mxu0
    %v1848 = vadd.f32 0.0, %v1847
    %v1849 = vpop.f32.mrb[0].mxu0
    %1850 = vdwg.mxu0
    %v1852 = vrot.slane %v1848, 4
    %v1854 = vadd.f32 %v1127, %v1852
    %v1855 = vxor.u32 %v1854, 2147483648
    %v1856 = vmul.f32 %v1855, 1.442695
    %v1857 = vpow.pop %v1856
    %v1858 = vadd.f32 %v1857, 1.0
    %v1859 = vrcp.pop %v1858
    %v1860 = vmul.f32 1.0, %v1859
    %v1861 = vtanh.pop %v1854
    %v1863 = vrot.slane %v1764, 6
    %v1865 = vmul.f32 %v1860, %v1863
    %1867 = vrot.lane.b32.xlu0 %v1861, 64
    %v1868 = vpop.permute.xlu0 %1867
    %v1870 = vmul.f32 %v1860, %v1868
    %1872 = vrot.lane.b32.xlu0 %v1870, 32
    %v1873 = vpop.permute.xlu0 %1872
    %v1875 = vadd.f32 %v1865, %v1873
    %v1876 = vtanh.pop %v1875
    %1878 = vrot.lane.b32.xlu0 %v1876, 64
    %v1879 = vpop.permute.xlu0 %1878
    %v1881 = vmul.f32 %v1860, %v1879
    %1883 = vrot.lane.b32.xlu0 %v1881, 32
    %v1884 = vpop.permute.xlu0 %1883
    %1886 = vst.msk [vmem:[#allocation2 + $0x8] sm:$0x30] %vm480, %v1884
    %v1887 = vrot.slane %v1881, 4
    %1888 = vrot.lane.b32.xlu0 %v1887, 32
    %v1889 = vpop.permute.xlu0 %1888
    %v1890 = vsel %vm156, %v1889, 0
    %1892 = vmatprep.subr.mxu0 0.0
    %1893 = vmatpush1.msra.mxu0 %v1038
    %1894 = vmatprep.subr.mxu0 0.0
    %1895 = vmatpush1.msra.mxu0 %v1039
    %1896 = vmatprep.subr.mxu0 0.0
    %1897 = vmatpush1.msra.mxu0 %v1040
    %1898 = vmatprep.subr.mxu0 0.0
    %1899 = vmatpush1.msra.mxu0 %v1041
    %1900 = vmatprep.subr.mxu0 0.0
    %1901 = vmatpush1.msra.mxu0 0.0
    %1902 = vmatprep.subr.mxu0 0.0
    %1903 = vmatpush1.msra.mxu0 0.0
    %1904 = vmatprep.subr.mxu0 0.0
    %1905 = vmatpush1.msra.mxu0 0.0
    %1906 = vmatprep.subr.mxu0 0.0
    %1907 = vmatpush1.msra.mxu0 0.0
    %1908 = vmatprep.subr.mxu0 0.0
    %1909 = vmatpush1.msra.mxu0 0.0
    %1910 = vmatprep.subr.mxu0 0.0
    %1911 = vmatpush1.msra.mxu0 0.0
    %1912 = vmatprep.subr.mxu0 0.0
    %1913 = vmatpush1.msra.mxu0 0.0
    %1914 = vmatprep.subr.mxu0 0.0
    %1915 = vmatpush1.msra.mxu0 0.0
    %1916 = vmatprep.subr.mxu0 0.0
    %1917 = vmatpush1.msra.mxu0 0.0
    %1918 = vmatprep.subr.mxu0 0.0
    %1919 = vmatpush1.msra.mxu0 0.0
    %1920 = vmatprep.subr.mxu0 0.0
    %1921 = vmatpush1.msra.mxu0 0.0
    %1922 = vmatprep.subr.mxu0 0.0
    %1923 = vmatpush1.msra.mxu0 0.0
    %1924 = vmatprep.subr.mxu0 0.0
    %1925 = vmatpush1.msra.mxu0 0.0
    %1926 = vmatprep.subr.mxu0 0.0
    %1927 = vmatpush1.msra.mxu0 0.0
    %1928 = vmatprep.subr.mxu0 0.0
    %1929 = vmatpush1.msra.mxu0 0.0
    %1930 = vmatprep.subr.mxu0 0.0
    %1931 = vmatpush1.msra.mxu0 0.0
    %1932 = vmatprep.subr.mxu0 0.0
    %1933 = vmatpush1.msra.mxu0 0.0
    %1934 = vmatprep.subr.mxu0 0.0
    %1935 = vmatpush1.msra.mxu0 0.0
    %1936 = vmatprep.subr.mxu0 0.0
    %1937 = vmatpush1.msra.mxu0 0.0
    %1938 = vmatprep.subr.mxu0 0.0
    %1939 = vmatpush1.msra.mxu0 0.0
    %1940 = vmatprep.subr.mxu0 0.0
    %1941 = vmatpush1.msra.mxu0 0.0
    %1942 = vmatprep.subr.mxu0 0.0
    %1943 = vmatpush1.msra.mxu0 0.0
    %1944 = vmatprep.subr.mxu0 0.0
    %1945 = vmatpush1.msra.mxu0 0.0
    %1946 = vmatprep.subr.mxu0 0.0
    %1947 = vmatpush1.msra.mxu0 0.0
    %1948 = vmatprep.subr.mxu0 0.0
    %1949 = vmatpush1.msra.mxu0 0.0
    %1950 = vmatprep.subr.mxu0 0.0
    %1951 = vmatpush1.msra.mxu0 0.0
    %1952 = vmatprep.subr.mxu0 0.0
    %1953 = vmatpush1.msra.mxu0 0.0
    %1954 = vmatprep.subr.mxu0 0.0
    %1955 = vmatpush1.msra.mxu0 0.0
    %1956 = vmatprep.mubr.f32.mxu0 0.0
    %1957 = vmatmul.mubr.f32.gmra.mrb[0].mxu0 %v1890
    %v1958 = vpop.f32.mrb[0].mxu0
    %v1959 = vadd.f32 0.0, %v1958
    %v1960 = vpop.f32.mrb[0].mxu0
    %1961 = vdwg.mxu0
    %v1963 = vrot.slane %v1959, 2
    %v1965 = vadd.f32 %v1127, %v1963
    %v1966 = vxor.u32 %v1965, 2147483648
    %v1967 = vmul.f32 %v1966, 1.442695
    %v1968 = vpow.pop %v1967
    %v1969 = vadd.f32 %v1968, 1.0
    %v1970 = vrcp.pop %v1969
    %v1971 = vmul.f32 1.0, %v1970
    %v1972 = vtanh.pop %v1965
    %v1974 = vrot.slane %v1875, 6
    %v1976 = vmul.f32 %v1971, %v1974
    %1978 = vrot.lane.b32.xlu0 %v1972, 64
    %v1979 = vpop.permute.xlu0 %1978
    %v1981 = vmul.f32 %v1971, %v1979
    %1983 = vrot.lane.b32.xlu0 %v1981, 32
    %v1984 = vpop.permute.xlu0 %1983
    %v1986 = vadd.f32 %v1976, %v1984
    %v1987 = vtanh.pop %v1986
    %1989 = vrot.lane.b32.xlu0 %v1987, 64
    %v1990 = vpop.permute.xlu0 %1989
    %v1992 = vmul.f32 %v1971, %v1990
    %1994 = vrot.lane.b32.xlu0 %v1992, 32
    %v1995 = vpop.permute.xlu0 %1994
    %1997 = vst.msk [vmem:[#allocation2 + $0x8] sm:$0xc0] %vm592, %v1995
    %v1998 = vld [vmem:[#allocation2] sm:$0xff]
    %v1999 = vld [vmem:[#allocation2 + $0x8] sm:$0xff]
    %v2000 = vld [vmem:[%s7] sm:$0xff]
    %v2001 = vld [vmem:[%s7 + $0x8] sm:$0xff]
    %v2002 = vld [vmem:[%s7 + $0x10] sm:$0xff]
    %v2003 = vld [vmem:[%s7 + $0x18] sm:$0xff]
    %v2004 = vld [vmem:[#allocation5] sm:$0x1]
    %v2006 = vlaneseq
    %v2007 = vshrl.u32 %v2006, 7
    %v2008 = vsub.s32 0, %v2007
    %v2009 = vrot.slane %v2004, %v2008
    %v2012 = vsel %vm156, %v1998, 0
    %v2015 = vsel %vm156, %v1999, 0
    %2017 = vmatprep.subr.mxu0 0.0
    %2018 = vmatpush1.msra.mxu0 %v2000
    %2019 = vmatprep.subr.mxu0 0.0
    %2020 = vmatpush1.msra.mxu0 %v2001
    %2021 = vmatprep.subr.mxu0 0.0
    %2022 = vmatpush1.msra.mxu0 %v2002
    %2023 = vmatprep.subr.mxu0 0.0
    %2024 = vmatpush1.msra.mxu0 %v2003
    %2025 = vmatprep.subr.mxu0 0.0
    %2026 = vmatpush1.msra.mxu0 0.0
    %2027 = vmatprep.subr.mxu0 0.0
    %2028 = vmatpush1.msra.mxu0 0.0
    %2029 = vmatprep.subr.mxu0 0.0
    %2030 = vmatpush1.msra.mxu0 0.0
    %2031 = vmatprep.subr.mxu0 0.0
    %2032 = vmatpush1.msra.mxu0 0.0
    %2033 = vmatprep.subr.mxu0 0.0
    %2034 = vmatpush1.msra.mxu0 0.0
    %2035 = vmatprep.subr.mxu0 0.0
    %2036 = vmatpush1.msra.mxu0 0.0
    %2037 = vmatprep.subr.mxu0 0.0
    %2038 = vmatpush1.msra.mxu0 0.0
    %2039 = vmatprep.subr.mxu0 0.0
    %2040 = vmatpush1.msra.mxu0 0.0
    %2041 = vmatprep.subr.mxu0 0.0
    %2042 = vmatpush1.msra.mxu0 0.0
    %2043 = vmatprep.subr.mxu0 0.0
    %2044 = vmatpush1.msra.mxu0 0.0
    %2045 = vmatprep.subr.mxu0 0.0
    %2046 = vmatpush1.msra.mxu0 0.0
    %2047 = vmatprep.subr.mxu0 0.0
    %2048 = vmatpush1.msra.mxu0 0.0
    %2049 = vmatprep.subr.mxu0 0.0
    %2050 = vmatpush1.msra.mxu0 0.0
    %2051 = vmatprep.subr.mxu0 0.0
    %2052 = vmatpush1.msra.mxu0 0.0
    %2053 = vmatprep.subr.mxu0 0.0
    %2054 = vmatpush1.msra.mxu0 0.0
    %2055 = vmatprep.subr.mxu0 0.0
    %2056 = vmatpush1.msra.mxu0 0.0
    %2057 = vmatprep.subr.mxu0 0.0
    %2058 = vmatpush1.msra.mxu0 0.0
    %2059 = vmatprep.subr.mxu0 0.0
    %2060 = vmatpush1.msra.mxu0 0.0
    %2061 = vmatprep.subr.mxu0 0.0
    %2062 = vmatpush1.msra.mxu0 0.0
    %2063 = vmatprep.subr.mxu0 0.0
    %2064 = vmatpush1.msra.mxu0 0.0
    %2065 = vmatprep.subr.mxu0 0.0
    %2066 = vmatpush1.msra.mxu0 0.0
    %2067 = vmatprep.subr.mxu0 0.0
    %2068 = vmatpush1.msra.mxu0 0.0
    %2069 = vmatprep.subr.mxu0 0.0
    %2070 = vmatpush1.msra.mxu0 0.0
    %2071 = vmatprep.subr.mxu0 0.0
    %2072 = vmatpush1.msra.mxu0 0.0
    %2073 = vmatprep.subr.mxu0 0.0
    %2074 = vmatpush1.msra.mxu0 0.0
    %2075 = vmatprep.subr.mxu0 0.0
    %2076 = vmatpush1.msra.mxu0 0.0
    %2077 = vmatprep.subr.mxu0 0.0
    %2078 = vmatpush1.msra.mxu0 0.0
    %2079 = vmatprep.subr.mxu0 0.0
    %2080 = vmatpush1.msra.mxu0 0.0
    %2081 = vmatprep.mubr.f32.mxu0 0.0
    %2082 = vmatmul.mubr.f32.gmra.mrb[0].mxu0 %v2012
    %v2083 = vpop.f32.mrb[0].mxu0
    %v2084 = vadd.f32 %v2009, %v2083
    %v2085 = vpop.f32.mrb[0].mxu0
    %2086 = vmatprep.mubr.f32.mxu0 0.0
    %2087 = vmatmul.mubr.f32.gmra.mrb[0].mxu0 %v2015
    %v2088 = vpop.f32.mrb[0].mxu0
    %v2089 = vadd.f32 %v2009, %v2088
    %v2090 = vpop.f32.mrb[0].mxu0
    %2091 = vdwg.mxu0
    %vm2092 = vcmask 130048
    %2093 = vst.msk [vmem:[%s9] sm:$0xff] %vm2092, %v2084
    %2094 = vst.msk [vmem:[%s9 + $0x8] sm:$0xff] %vm2092, %v2089
    // Predicated region
    $region46: #{lstm_generator_forward.1} parent=1 // pred_check
      _
    $region47: #{lstm_generator_forward.1} parent=1 // pred_check_branch
      %2096 = sbr.rel (0) target = $region49
    $region48: #{lstm_generator_forward.1} parent=1 // pred_region
      _
    $region49: #{lstm_generator_forward.1} parent=1 // pred_fallthru
      _
    // Predicated region
    $region50: #{lstm_generator_forward.1} parent=1 // pred_check
      _
    $region51: #{lstm_generator_forward.1} parent=1 // pred_check_branch
      %2098 = sbr.rel (0) target = $region53
    $region52: #{lstm_generator_forward.1} parent=1 // pred_region
      _
    $region53: #{lstm_generator_forward.1} parent=1 // pred_fallthru
      _
    %2099 = vsyncpa [#allocation4], 1
    %2100 = vsyncpa [#allocation6], 1

</llo_original>
